<compile_context>
chip_gen: v6e
topology: v6e:2x2x1
jax: 0.10.0
libtpu: 0.0.40
codegen_flags: <defaults>
</compile_context>

<pallas_src>
import jax
import jax.numpy as jnp
from jax.experimental import pallas as pl
from jax.experimental.pallas import tpu as pltpu

NEG = -1e9  # large finite mask value (avoids -inf / finfo.min overflow)


def _round_up(x, m):
    return (x + m - 1) // m * m


# --------------------------- tiled matmul kernel ----------------------------

def _matmul_kernel(x_ref, w_ref, o_ref, acc_ref):
    @pl.when(pl.program_id(2) == 0)
    def _():
        acc_ref[...] = jnp.zeros_like(acc_ref)

    acc_ref[...] += jnp.dot(x_ref[...], w_ref[...],
                            preferred_element_type=jnp.float32)

    @pl.when(pl.program_id(2) == pl.num_programs(2) - 1)
    def _():
        o_ref[...] = acc_ref[...].astype(o_ref.dtype)


def pallas_matmul(x, w):
    """(M,K) x (K,N) -> (M,N) f32; bf16 MXU inputs, f32 accumulation, tiled grid."""
    M, K = x.shape
    K2, N = w.shape
    assert K == K2
    tm = min(256, _round_up(M, 8))
    tn = min(256, _round_up(N, 128))
    tk = min(512, _round_up(K, 128))
    Mp, Kp, Np = _round_up(M, tm), _round_up(K, tk), _round_up(N, tn)
    xb = x.astype(jnp.bfloat16)
    wb = w.astype(jnp.bfloat16)
    if (Mp, Kp) != (M, K):
        xb = jnp.pad(xb, ((0, Mp - M), (0, Kp - K)))
    if (Kp, Np) != (K, N):
        wb = jnp.pad(wb, ((0, Kp - K), (0, Np - N)))
    out = pl.pallas_call(
        _matmul_kernel,
        out_shape=jax.ShapeDtypeStruct((Mp, Np), jnp.float32),
        grid=(Mp // tm, Np // tn, Kp // tk),
        in_specs=[pl.BlockSpec((tm, tk), lambda i, j, k: (i, k)),
                  pl.BlockSpec((tk, tn), lambda i, j, k: (k, j))],
        out_specs=pl.BlockSpec((tm, tn), lambda i, j, k: (i, j)),
        scratch_shapes=[pltpu.VMEM((tm, tn), jnp.float32)],
        compiler_params=pltpu.CompilerParams(
            dimension_semantics=("parallel", "parallel", "arbitrary")),
        cost_estimate=pl.CostEstimate(
            flops=2 * Mp * Np * Kp,
            transcendentals=0,
            bytes_accessed=2 * Mp * Kp + 2 * Kp * Np + 4 * Mp * Np),
    )(xb, wb)
    return out[:M, :N]


# ------------------------------ FFN kernel ----------------------------------

def _ffn_kernel(x_ref, wi_ref, wo_ref, o_ref, acc_ref):
    @pl.when(pl.program_id(1) == 0)
    def _():
        acc_ref[...] = jnp.zeros_like(acc_ref)

    h = jnp.dot(x_ref[...], wi_ref[...], preferred_element_type=jnp.float32)
    h = jnp.maximum(h, 0.0)  # T5 DenseReluDense; ReLU kept in f32 (VPU)
    acc_ref[...] += jnp.dot(h.astype(jnp.bfloat16), wo_ref[...],
                            preferred_element_type=jnp.float32)

    @pl.when(pl.program_id(1) == pl.num_programs(1) - 1)
    def _():
        o_ref[...] = acc_ref[...]


def pallas_ffn(x, wi, wo):
    """Row-tiled, F-chunk-accumulated dense->relu->dense; never holds (rows,F)."""
    B, S, D = x.shape
    rows = B * S
    F = wi.shape[1]
    tm = min(256, _round_up(rows, 8))
    tf = F if F <= 512 else 512
    rows_p = _round_up(rows, tm)
    Fp = _round_up(F, tf)
    xb = x.reshape(rows, D).astype(jnp.bfloat16)
    wi_b = wi.astype(jnp.bfloat16)
    wo_b = wo.astype(jnp.bfloat16)
    if rows_p != rows:
        xb = jnp.pad(xb, ((0, rows_p - rows), (0, 0)))
    if Fp != F:
        wi_b = jnp.pad(wi_b, ((0, 0), (0, Fp - F)))
        wo_b = jnp.pad(wo_b, ((0, Fp - F), (0, 0)))
    out = pl.pallas_call(
        _ffn_kernel,
        out_shape=jax.ShapeDtypeStruct((rows_p, D), jnp.float32),
        grid=(rows_p // tm, Fp // tf),
        in_specs=[pl.BlockSpec((tm, D), lambda i, f: (i, 0)),
                  pl.BlockSpec((D, tf), lambda i, f: (0, f)),
                  pl.BlockSpec((tf, D), lambda i, f: (f, 0))],
        out_specs=pl.BlockSpec((tm, D), lambda i, f: (i, 0)),
        scratch_shapes=[pltpu.VMEM((tm, D), jnp.float32)],
        compiler_params=pltpu.CompilerParams(
            dimension_semantics=("parallel", "arbitrary")),
        cost_estimate=pl.CostEstimate(
            flops=4 * rows_p * Fp * D,
            transcendentals=0,
            bytes_accessed=2 * rows_p * D + 4 * D * Fp + 4 * rows_p * D),
    )(xb, wi_b, wo_b)
    return out[:rows].reshape(B, S, D)


# ----------------------------- RMSNorm kernel --------------------------------

def _rmsnorm_kernel(x_ref, w_ref, o_ref):
    # T5 LayerNorm: no mean subtraction, no bias; f32 math.
    x = x_ref[...]
    var = jnp.mean(x * x, axis=-1, keepdims=True)
    o_ref[...] = x * jax.lax.rsqrt(var + 1e-6) * w_ref[...]


def pallas_rmsnorm(x, w):
    B, S, D = x.shape
    rows = B * S
    tm = min(512, _round_up(rows, 8))
    rows_p = _round_up(rows, tm)
    xf = x.reshape(rows, D)
    if rows_p != rows:
        xf = jnp.pad(xf, ((0, rows_p - rows), (0, 0)))
    out = pl.pallas_call(
        _rmsnorm_kernel,
        out_shape=jax.ShapeDtypeStruct((rows_p, D), jnp.float32),
        grid=(rows_p // tm,),
        in_specs=[pl.BlockSpec((tm, D), lambda i: (i, 0)),
                  pl.BlockSpec((1, D), lambda i: (0, 0))],
        out_specs=pl.BlockSpec((tm, D), lambda i: (i, 0)),
        compiler_params=pltpu.CompilerParams(
            dimension_semantics=("parallel",)),
    )(xf, w.reshape(1, D))
    return out[:rows].reshape(B, S, D)


# ----------------------------- attention kernel ------------------------------

def _attn_kernel(q_ref, k_ref, v_ref, pb_ref, m_ref, o_ref):
    q = q_ref[0]                       # (H, Sq, Dh) bf16
    k = k_ref[0]                       # (H, Sk, Dh) bf16
    v = v_ref[0]                       # (H, Sk, Dh) bf16
    bias = pb_ref[0] + m_ref[0, 0]     # (H,Sq,Sk) f32: shared pos-bias + key mask
    # T5 attention is NOT scaled by sqrt(d_k). Contract last dims -> no K transpose.
    s = jnp.einsum("hqd,hkd->hqk", q, k,
                   preferred_element_type=jnp.float32) + bias
    m = jnp.max(s, axis=-1, keepdims=True)
    p = jnp.exp(s - m)
    denom = jnp.maximum(jnp.sum(p, axis=-1, keepdims=True), 1e-20)  # NaN guard
    p = p * pl.reciprocal(denom, approx=True)
    o_ref[0] = jnp.einsum("hqk,hkd->hqd", p.astype(jnp.bfloat16), v,
                          preferred_element_type=jnp.float32)


def pallas_attention(q, k, v, pos_bias, key_mask):
    # q/k/v: (B, H, S, Dh) bf16; pos_bias: (1, H, Sq, Sk) f32; key_mask: (B,1,1,Sk) f32
    # TODO(synk): for long sequences, tile Sq and run online-softmax over Sk chunks.
    B, H, Sq, Dh = q.shape
    Sk = k.shape[2]
    return pl.pallas_call(
        _attn_kernel,
        out_shape=jax.ShapeDtypeStruct((B, H, Sq, Dh), jnp.float32),
        grid=(B,),
        in_specs=[pl.BlockSpec((1, H, Sq, Dh), lambda b: (b, 0, 0, 0)),
                  pl.BlockSpec((1, H, Sk, Dh), lambda b: (b, 0, 0, 0)),
                  pl.BlockSpec((1, H, Sk, Dh), lambda b: (b, 0, 0, 0)),
                  pl.BlockSpec((1, H, Sq, Sk), lambda b: (0, 0, 0, 0)),
                  pl.BlockSpec((1, 1, 1, Sk), lambda b: (b, 0, 0, 0))],
        out_specs=pl.BlockSpec((1, H, Sq, Dh), lambda b: (b, 0, 0, 0)),
        compiler_params=pltpu.CompilerParams(
            dimension_semantics=("parallel",)),
        cost_estimate=pl.CostEstimate(
            flops=4 * B * H * Sq * Sk * Dh,
            transcendentals=B * H * Sq * Sk,
            bytes_accessed=(2 * B * H * (Sq + 2 * Sk) * Dh
                            + 4 * H * Sq * Sk + 4 * B * Sk
                            + 4 * B * H * Sq * Dh)),
    )(q, k, v, pos_bias, key_mask)


# ------------------------------ JAX glue -------------------------------------

def _relative_position_bucket(relative_position, bidirectional,
                              num_buckets=32, max_distance=128):
    relative_buckets = jnp.zeros_like(relative_position)
    if bidirectional:
        num_buckets = num_buckets // 2
        relative_buckets = relative_buckets + \
            (relative_position > 0).astype(jnp.int32) * num_buckets
        relative_position = jnp.abs(relative_position)
    else:
        relative_position = -jnp.minimum(relative_position, 0)
    max_exact = num_buckets // 2
    is_small = relative_position < max_exact
    rp_f = jnp.maximum(relative_position, 1).astype(jnp.float32)
    rel_if_large = max_exact + (
        jnp.log(rp_f / max_exact) / jnp.log(max_distance / max_exact)
        * (num_buckets - max_exact)
    ).astype(jnp.int32)
    rel_if_large = jnp.minimum(rel_if_large, num_buckets - 1)
    return relative_buckets + jnp.where(is_small, relative_position, rel_if_large)


def compute_position_bias(q_len, k_len, table, bidirectional, cfg):
    ctx = jnp.arange(q_len, dtype=jnp.int32)[:, None]
    mem = jnp.arange(k_len, dtype=jnp.int32)[None, :]
    rp = mem - ctx
    buckets = _relative_position_bucket(
        rp, bidirectional,
        num_buckets=cfg["rel_buckets"], max_distance=cfg["rel_max_dist"])
    values = table[buckets]                         # (q, k, H)
    return jnp.transpose(values, (2, 0, 1))[None]   # (1, H, q, k)


def multi_head_attention(x, p, pos_bias, key_mask, cfg, kv=None):
    B, Sq, D = x.shape
    H, Dh = cfg["num_heads"], cfg["d_kv"]
    inner = H * Dh
    if kv is None:                                   # self-attention: fused QKV
        Sk = Sq
        qkv = pallas_matmul(x.reshape(B * Sq, D),
                            jnp.concatenate([p["q"], p["k"], p["v"]], axis=1))
        q, k, v = jnp.split(qkv, 3, axis=1)
    else:                                            # cross-attention: fused KV
        Sk = kv.shape[1]
        q = pallas_matmul(x.reshape(B * Sq, D), p["q"])
        kvp = pallas_matmul(kv.reshape(B * Sk, D),
                            jnp.concatenate([p["k"], p["v"]], axis=1))
        k, v = jnp.split(kvp, 2, axis=1)
    q = q.astype(jnp.bfloat16).reshape(B, Sq, H, Dh).transpose(0, 2, 1, 3)
    k = k.astype(jnp.bfloat16).reshape(B, Sk, H, Dh).transpose(0, 2, 1, 3)
    v = v.astype(jnp.bfloat16).reshape(B, Sk, H, Dh).transpose(0, 2, 1, 3)
    ctx = pallas_attention(q, k, v, pos_bias, key_mask)   # (B, H, Sq, Dh) f32
    ctx = ctx.transpose(0, 2, 1, 3).reshape(B * Sq, inner)
    return pallas_matmul(ctx, p["o"]).reshape(B, Sq, D)


def t5_encoder(input_ids, att_mask, params, cfg):
    B, S = input_ids.shape
    x = params["shared"][input_ids]                               # (B, S, D)
    key_mask = (1.0 - att_mask.astype(jnp.float32)).reshape(B, 1, 1, S) * NEG
    pos_bias = compute_position_bias(S, S, params["enc_rel_bias"], True, cfg)
    for lyr in params["enc_layers"]:
        h = pallas_rmsnorm(x, lyr["ln0"])
        x = x + multi_head_attention(h, lyr["sa"], pos_bias, key_mask, cfg)
        h = pallas_rmsnorm(x, lyr["ln1"])
        x = x + pallas_ffn(h, lyr["wi"], lyr["wo"])
    return pallas_rmsnorm(x, params["enc_final_ln"])


def t5_decoder(decoder_ids, enc_out, enc_mask, params, cfg):
    B, S = decoder_ids.shape
    Se = enc_out.shape[1]
    H = cfg["num_heads"]
    x = params["shared"][decoder_ids]
    causal = jnp.tril(jnp.ones((S, S), dtype=jnp.float32))
    self_bias = compute_position_bias(S, S, params["dec_rel_bias"], False, cfg) \
        + (1.0 - causal)[None, None] * NEG                         # (1, H, S, S)
    self_key_mask = jnp.zeros((B, 1, 1, S), jnp.float32)
    cross_bias = jnp.zeros((1, H, S, Se), jnp.float32)
    cross_key_mask = (1.0 - enc_mask.astype(jnp.float32)).reshape(B, 1, 1, Se) * NEG
    for lyr in params["dec_layers"]:
        h = pallas_rmsnorm(x, lyr["ln0"])
        x = x + multi_head_attention(h, lyr["sa"], self_bias, self_key_mask, cfg)
        h = pallas_rmsnorm(x, lyr["ln1"])
        x = x + multi_head_attention(h, lyr["ca"], cross_bias, cross_key_mask,
                                     cfg, kv=enc_out)
        h = pallas_rmsnorm(x, lyr["ln2"])
        x = x + pallas_ffn(h, lyr["wi"], lyr["wo"])
    return pallas_rmsnorm(x, params["dec_final_ln"])


def model_wrap_forward(input_ids, att_mask, decoder_ids, params, cfg):
    # ModelWrap.forward: return model(...).last_hidden_state
    # (decoder's final hidden states, shape [B, dec_seq, d_model])
    enc_out = t5_encoder(input_ids, att_mask, params, cfg)
    return t5_decoder(decoder_ids, enc_out, att_mask, params, cfg)


# ---------------------------- parameter init ---------------------------------

def init_params(key, cfg):
    D, H, Dh, F = cfg["d_model"], cfg["num_heads"], cfg["d_kv"], cfg["d_ff"]
    inner = H * Dh
    keys = iter(jax.random.split(key, 256))

    def nrm(shape, scale=0.05):
        return scale * jax.random.normal(next(keys), shape, dtype=jnp.float32)

    def attn_params():
        return {"q": nrm((D, inner)), "k": nrm((D, inner)),
                "v": nrm((D, inner)), "o": nrm((inner, D))}

    def enc_layer():
        return {"sa": attn_params(),
                "ln0": jnp.ones((D,), jnp.float32),
                "ln1": jnp.ones((D,), jnp.float32),
                "wi": nrm((D, F)), "wo": nrm((F, D))}

    def dec_layer():
        return {"sa": attn_params(), "ca": attn_params(),
                "ln0": jnp.ones((D,), jnp.float32),
                "ln1": jnp.ones((D,), jnp.float32),
                "ln2": jnp.ones((D,), jnp.float32),
                "wi": nrm((D, F)), "wo": nrm((F, D))}

    return {
        "shared": nrm((cfg["vocab"], D), scale=0.5),
        "enc_rel_bias": nrm((cfg["rel_buckets"], H)),
        "dec_rel_bias": nrm((cfg["rel_buckets"], H)),
        "enc_layers": [enc_layer() for _ in range(cfg["num_layers"])],
        "dec_layers": [dec_layer() for _ in range(cfg["num_layers"])],
        "enc_final_ln": jnp.ones((D,), jnp.float32),
        "dec_final_ln": jnp.ones((D,), jnp.float32),
    }


# --------------------------------- main ---------------------------------------

if __name__ == "__main__":
    cfg = dict(vocab=128, d_model=32, num_heads=4, d_kv=8, d_ff=64,
               num_layers=2, rel_buckets=32, rel_max_dist=128)

    key = jax.random.PRNGKey(0)
    k_p, k_in, k_dec = jax.random.split(key, 3)

    B, Se, Sd = 2, 8, 8
    params = init_params(k_p, cfg)
    input_ids = jax.random.randint(k_in, (B, Se), 0, cfg["vocab"], dtype=jnp.int32)
    decoder_ids = jax.random.randint(k_dec, (B, Sd), 0, cfg["vocab"], dtype=jnp.int32)
    att_mask = jnp.ones((B, Se), dtype=jnp.int32).at[1, 6:].set(0)  # pad tail of batch 1

    # TODO(synk): dropout layers of T5 are eval-mode no-ops and are omitted.
    fwd = jax.jit(lambda ii, am, di, pp: model_wrap_forward(ii, am, di, pp, cfg))
    out = jax.block_until_ready(fwd(input_ids, att_mask, decoder_ids, params))

    assert out.shape == (B, Sd, cfg["d_model"]) and out.dtype == jnp.float32
    assert bool(jnp.all(jnp.isfinite(out)))
    print("KERNEL_OK")
</pallas_src>

<mosaic_0001>
module attributes {stable_mosaic.version = 11 : i64} {
  func.func @_rmsnorm_kernel(%arg0: i32, %arg1: memref<16x32xf32, #tpu.memory_space<vmem>>, %arg2: memref<1x32xf32, #tpu.memory_space<vmem>>, %arg3: memref<16x32xf32, #tpu.memory_space<vmem>>) attributes {dimension_semantics = [#tpu.dimension_semantics<parallel>], iteration_bounds = array<i64: 1>, scalar_prefetch = 0 : i64, scratch_operands = 0 : i64, tpu.core_type = #tpu.core_type<tc>, window_params = [{transform_indices = @transform_0, window_bounds = array<i64: 16, 32>}, {pipeline_mode = #tpu.pipeline_mode<synchronous>, transform_indices = @transform_1, window_bounds = array<i64: 1, 32>}, {transform_indices = @transform_2, window_bounds = array<i64: 16, 32>}]} {
    %c0 = arith.constant 0 : index
    %c0_0 = arith.constant 0 : index
    %0 = vector.load %arg1[%c0, %c0_0] : memref<16x32xf32, #tpu.memory_space<vmem>>, vector<16x32xf32>
    %1 = arith.mulf %0, %0 : vector<16x32xf32>
    %cst = arith.constant dense<0.000000e+00> : vector<16xf32>
    %2 = vector.multi_reduction <add>, %1, %cst [1] : vector<16x32xf32> to vector<16xf32>
    %3 = vector.shape_cast %2 : vector<16xf32> to vector<16x1xf32>
    %cst_1 = arith.constant 3.200000e+01 : f32
    %4 = vector.broadcast %cst_1 : f32 to vector<16x1xf32>
    %5 = arith.divf %3, %4 : vector<16x1xf32>
    %cst_2 = arith.constant 9.99999997E-7 : f32
    %6 = vector.broadcast %cst_2 : f32 to vector<16x1xf32>
    %7 = arith.addf %5, %6 : vector<16x1xf32>
    %8 = math.rsqrt %7 : vector<16x1xf32>
    %9 = vector.broadcast %8 : vector<16x1xf32> to vector<16x32xf32>
    %10 = arith.mulf %0, %9 : vector<16x32xf32>
    %c0_3 = arith.constant 0 : index
    %c0_4 = arith.constant 0 : index
    %11 = vector.load %arg2[%c0_3, %c0_4] : memref<1x32xf32, #tpu.memory_space<vmem>>, vector<1x32xf32>
    %12 = vector.broadcast %11 : vector<1x32xf32> to vector<16x32xf32>
    %13 = arith.mulf %10, %12 : vector<16x32xf32>
    %c0_5 = arith.constant 0 : index
    %c0_6 = arith.constant 0 : index
    %14 = vector.load %arg3[%c0_5, %c0_6] : memref<16x32xf32, #tpu.memory_space<vmem>>, vector<16x32xf32>
    tpu.vector_store %arg3[%c0_5, %c0_6], %13 {strides = array<i32>} : memref<16x32xf32, #tpu.memory_space<vmem>>, vector<16x32xf32>,
    return
  }
  func.func @transform_0(%arg0: i32) -> (i32, i32) {
    %c0_i32 = arith.constant 0 : i32
    %c0_i32_0 = arith.constant 0 : i32
    return %arg0, %c0_i32 : i32, i32
  }
  func.func @transform_1(%arg0: i32) -> (i32, i32) {
    %c0_i32 = arith.constant 0 : i32
    %c0_i32_0 = arith.constant 0 : i32
    %c0_i32_1 = arith.constant 0 : i32
    return %c0_i32, %c0_i32_0 : i32, i32
  }
  func.func @transform_2(%arg0: i32) -> (i32, i32) {
    %c0_i32 = arith.constant 0 : i32
    %c0_i32_0 = arith.constant 0 : i32
    return %arg0, %c0_i32 : i32, i32
  }
}

module attributes {stable_mosaic.version = 11 : i64} {
  func.func @_matmul_kernel(%arg0: i32, %arg1: i32, %arg2: i32, %arg3: memref<16x128xbf16, #tpu.memory_space<vmem>>, %arg4: memref<128x128xbf16, #tpu.memory_space<vmem>>, %arg5: memref<16x128xf32, #tpu.memory_space<vmem>>, %arg6: memref<16x128xf32, #tpu.memory_space<vmem>>) attributes {dimension_semantics = [#tpu.dimension_semantics<parallel>, #tpu.dimension_semantics<parallel>, #tpu.dimension_semantics<arbitrary>], iteration_bounds = array<i64: 1, 1, 1>, scalar_prefetch = 0 : i64, scratch_operands = 1 : i64, tpu.core_type = #tpu.core_type<tc>, window_params = [{transform_indices = @transform_0, window_bounds = array<i64: 16, 128>}, {transform_indices = @transform_1, window_bounds = array<i64: 128, 128>}, {transform_indices = @transform_2, window_bounds = array<i64: 16, 128>}]} {
    %c0_i32 = arith.constant 0 : i32
    %0 = arith.cmpi eq, %arg2, %c0_i32 : i32
    %1 = arith.extui %0 : i1 to i32
    %c0_i32_0 = arith.constant 0 : i32
    %2 = arith.cmpi ne, %1, %c0_i32_0 : i32
    scf.if %2 {
      %cst_10 = arith.constant 0.000000e+00 : f32
      %12 = vector.broadcast %cst_10 : f32 to vector<16x128xf32>
      %c0_11 = arith.constant 0 : index
      %c0_12 = arith.constant 0 : index
      %13 = vector.load %arg6[%c0_11, %c0_12] : memref<16x128xf32, #tpu.memory_space<vmem>>, vector<16x128xf32>
      tpu.vector_store %arg6[%c0_11, %c0_12], %12 {strides = array<i32>} : memref<16x128xf32, #tpu.memory_space<vmem>>, vector<16x128xf32>,
    } else {
    }
    %c0 = arith.constant 0 : index
    %c0_1 = arith.constant 0 : index
    %3 = vector.load %arg6[%c0, %c0_1] : memref<16x128xf32, #tpu.memory_space<vmem>>, vector<16x128xf32>
    %c0_2 = arith.constant 0 : index
    %c0_3 = arith.constant 0 : index
    %4 = vector.load %arg3[%c0_2, %c0_3] : memref<16x128xbf16, #tpu.memory_space<vmem>>, vector<16x128xbf16>
    %c0_4 = arith.constant 0 : index
    %c0_5 = arith.constant 0 : index
    %5 = vector.load %arg4[%c0_4, %c0_5] : memref<128x128xbf16, #tpu.memory_space<vmem>>, vector<128x128xbf16>
    %cst = arith.constant dense<0.000000e+00> : vector<16x128xf32>
    %6 = tpu.matmul %4, %5, %cst {dimension_numbers = #tpu.dot_dimension_numbers<[1], [0], [0], [1], [0, 0, 1, 1], [], []>} : vector<16x128xbf16>, vector<128x128xbf16>, vector<16x128xf32> -> vector<16x128xf32>
    %7 = arith.addf %3, %6 : vector<16x128xf32>
    %c0_6 = arith.constant 0 : index
    %c0_7 = arith.constant 0 : index
    %8 = vector.load %arg6[%c0_6, %c0_7] : memref<16x128xf32, #tpu.memory_space<vmem>>, vector<16x128xf32>
    tpu.vector_store %arg6[%c0_6, %c0_7], %7 {strides = array<i32>} : memref<16x128xf32, #tpu.memory_space<vmem>>, vector<16x128xf32>,
    %c0_i32_8 = arith.constant 0 : i32
    %9 = arith.cmpi eq, %arg2, %c0_i32_8 : i32
    %10 = arith.extui %9 : i1 to i32
    %c0_i32_9 = arith.constant 0 : i32
    %11 = arith.cmpi ne, %10, %c0_i32_9 : i32
    scf.if %11 {
      %c0_10 = arith.constant 0 : index
      %c0_11 = arith.constant 0 : index
      %12 = vector.load %arg6[%c0_10, %c0_11] : memref<16x128xf32, #tpu.memory_space<vmem>>, vector<16x128xf32>
      %c0_12 = arith.constant 0 : index
      %c0_13 = arith.constant 0 : index
      %13 = vector.load %arg5[%c0_12, %c0_13] : memref<16x128xf32, #tpu.memory_space<vmem>>, vector<16x128xf32>
      tpu.vector_store %arg5[%c0_12, %c0_13], %12 {strides = array<i32>} : memref<16x128xf32, #tpu.memory_space<vmem>>, vector<16x128xf32>,
    } else {
    }
    return
  }
  func.func @transform_0(%arg0: i32, %arg1: i32, %arg2: i32) -> (i32, i32) {
    %c0_i32 = arith.constant 0 : i32
    return %arg0, %arg2 : i32, i32
  }
  func.func @transform_1(%arg0: i32, %arg1: i32, %arg2: i32) -> (i32, i32) {
    %c0_i32 = arith.constant 0 : i32
    return %arg2, %arg1 : i32, i32
  }
  func.func @transform_2(%arg0: i32, %arg1: i32, %arg2: i32) -> (i32, i32) {
    %c0_i32 = arith.constant 0 : i32
    return %arg0, %arg1 : i32, i32
  }
}

module attributes {stable_mosaic.version = 11 : i64} {
  func.func @_attn_kernel(%arg0: i32, %arg1: memref<1x4x8x8xbf16, #tpu.memory_space<vmem>>, %arg2: memref<1x4x8x8xbf16, #tpu.memory_space<vmem>>, %arg3: memref<1x4x8x8xbf16, #tpu.memory_space<vmem>>, %arg4: memref<1x4x8x8xf32, #tpu.memory_space<vmem>>, %arg5: memref<1x1x1x8xf32, #tpu.memory_space<vmem>>, %arg6: memref<1x4x8x8xf32, #tpu.memory_space<vmem>>) attributes {dimension_semantics = [#tpu.dimension_semantics<parallel>], iteration_bounds = array<i64: 2>, scalar_prefetch = 0 : i64, scratch_operands = 0 : i64, tpu.core_type = #tpu.core_type<tc>, window_params = [{transform_indices = @transform_0, window_bounds = array<i64: 1, 4, 8, 8>}, {transform_indices = @transform_1, window_bounds = array<i64: 1, 4, 8, 8>}, {transform_indices = @transform_2, window_bounds = array<i64: 1, 4, 8, 8>}, {pipeline_mode = #tpu.pipeline_mode<synchronous>, transform_indices = @transform_3, window_bounds = array<i64: 1, 4, 8, 8>}, {transform_indices = @transform_4, window_bounds = array<i64: 1, 1, 1, 8>}, {transform_indices = @transform_5, window_bounds = array<i64: 1, 4, 8, 8>}]} {
    %c0 = arith.constant 0 : index
    %c0_0 = arith.constant 0 : index
    %c0_1 = arith.constant 0 : index
    %c0_2 = arith.constant 0 : index
    %0 = vector.load %arg1[%c0, %c0_0, %c0_1, %c0_2] : memref<1x4x8x8xbf16, #tpu.memory_space<vmem>>, vector<1x4x8x8xbf16>
    %1 = vector.shape_cast %0 : vector<1x4x8x8xbf16> to vector<4x8x8xbf16>
    %c0_3 = arith.constant 0 : index
    %c0_4 = arith.constant 0 : index
    %c0_5 = arith.constant 0 : index
    %c0_6 = arith.constant 0 : index
    %2 = vector.load %arg2[%c0_3, %c0_4, %c0_5, %c0_6] : memref<1x4x8x8xbf16, #tpu.memory_space<vmem>>, vector<1x4x8x8xbf16>
    %3 = vector.shape_cast %2 : vector<1x4x8x8xbf16> to vector<4x8x8xbf16>
    %c0_7 = arith.constant 0 : index
    %c0_8 = arith.constant 0 : index
    %c0_9 = arith.constant 0 : index
    %c0_10 = arith.constant 0 : index
    %4 = vector.load %arg3[%c0_7, %c0_8, %c0_9, %c0_10] : memref<1x4x8x8xbf16, #tpu.memory_space<vmem>>, vector<1x4x8x8xbf16>
    %5 = vector.shape_cast %4 : vector<1x4x8x8xbf16> to vector<4x8x8xbf16>
    %c0_11 = arith.constant 0 : index
    %c0_12 = arith.constant 0 : index
    %c0_13 = arith.constant 0 : index
    %c0_14 = arith.constant 0 : index
    %6 = vector.load %arg4[%c0_11, %c0_12, %c0_13, %c0_14] : memref<1x4x8x8xf32, #tpu.memory_space<vmem>>, vector<1x4x8x8xf32>
    %7 = vector.shape_cast %6 : vector<1x4x8x8xf32> to vector<4x8x8xf32>
    %c0_15 = arith.constant 0 : index
    %c0_16 = arith.constant 0 : index
    %c0_17 = arith.constant 0 : index
    %c0_18 = arith.constant 0 : index
    %8 = vector.load %arg5[%c0_15, %c0_16, %c0_17, %c0_18] : memref<1x1x1x8xf32, #tpu.memory_space<vmem>>, vector<1x1x1x8xf32>
    %9 = vector.shape_cast %8 : vector<1x1x1x8xf32> to vector<1x8xf32>
    %10 = vector.shape_cast %9 : vector<1x8xf32> to vector<1x1x8xf32>
    %11 = vector.broadcast %10 : vector<1x1x8xf32> to vector<4x8x8xf32>
    %12 = arith.addf %7, %11 : vector<4x8x8xf32>
    "tpu.trace_start"() <{level = 10 : i32, message = "hqd,hkd->hqk"}> : () -> ()
    %cst = arith.constant dense<0.000000e+00> : vector<4x8x8xf32>
    %13 = tpu.matmul %1, %3, %cst {dimension_numbers = #tpu.dot_dimension_numbers<[2], [2], [1], [1], [0, 0, 0, 1, 1, 1], [0], [0]>} : vector<4x8x8xbf16>, vector<4x8x8xbf16>, vector<4x8x8xf32> -> vector<4x8x8xf32>
    "tpu.trace_stop"() : () -> ()
    %14 = arith.addf %13, %12 : vector<4x8x8xf32>
    %cst_19 = arith.constant dense<0xFF800000> : vector<4x8xf32>
    %15 = vector.multi_reduction <maximumf>, %14, %cst_19 [2] : vector<4x8x8xf32> to vector<4x8xf32>
    %16 = vector.shape_cast %15 : vector<4x8xf32> to vector<4x8x1xf32>
    %17 = vector.broadcast %16 : vector<4x8x1xf32> to vector<4x8x8xf32>
    %18 = arith.subf %14, %17 : vector<4x8x8xf32>
    %19 = math.exp %18 : vector<4x8x8xf32>
    %cst_20 = arith.constant dense<0.000000e+00> : vector<4x8xf32>
    %20 = vector.multi_reduction <add>, %19, %cst_20 [2] : vector<4x8x8xf32> to vector<4x8xf32>
    %21 = vector.shape_cast %20 : vector<4x8xf32> to vector<4x8x1xf32>
    %cst_21 = arith.constant 9.99999968E-21 : f32
    %22 = vector.broadcast %cst_21 : f32 to vector<4x8x1xf32>
    %23 = arith.maximumf %21, %22 : vector<4x8x1xf32>
    %24 = tpu.reciprocal %23 {approx = true} : vector<4x8x1xf32> -> vector<4x8x1xf32>
    %25 = vector.broadcast %24 : vector<4x8x1xf32> to vector<4x8x8xf32>
    %26 = arith.mulf %19, %25 : vector<4x8x8xf32>
    %27 = arith.truncf %26 : vector<4x8x8xf32> to vector<4x8x8xbf16>
    "tpu.trace_start"() <{level = 10 : i32, message = "hqk,hkd->hqd"}> : () -> ()
    %cst_22 = arith.constant dense<0.000000e+00> : vector<4x8x8xf32>
    %28 = tpu.matmul %27, %5, %cst_22 {dimension_numbers = #tpu.dot_dimension_numbers<[2], [1], [1], [2], [0, 0, 0, 1, 1, 2], [0], [0]>} : vector<4x8x8xbf16>, vector<4x8x8xbf16>, vector<4x8x8xf32> -> vector<4x8x8xf32>
    "tpu.trace_stop"() : () -> ()
    %c0_23 = arith.constant 0 : index
    %c0_24 = arith.constant 0 : index
    %c0_25 = arith.constant 0 : index
    %c0_26 = arith.constant 0 : index
    %29 = vector.load %arg6[%c0_23, %c0_24, %c0_25, %c0_26] : memref<1x4x8x8xf32, #tpu.memory_space<vmem>>, vector<1x4x8x8xf32>
    %30 = vector.shape_cast %29 : vector<1x4x8x8xf32> to vector<4x8x8xf32>
    %31 = vector.shape_cast %28 : vector<4x8x8xf32> to vector<1x4x8x8xf32>
    tpu.vector_store %arg6[%c0_23, %c0_24, %c0_25, %c0_26], %31 {strides = array<i32>} : memref<1x4x8x8xf32, #tpu.memory_space<vmem>>, vector<1x4x8x8xf32>,
    return
  }
  func.func @transform_0(%arg0: i32) -> (i32, i32, i32, i32) {
    %c0_i32 = arith.constant 0 : i32
    %c0_i32_0 = arith.constant 0 : i32
    %c0_i32_1 = arith.constant 0 : i32
    %c0_i32_2 = arith.constant 0 : i32
    return %arg0, %c0_i32, %c0_i32_0, %c0_i32_1 : i32, i32, i32, i32
  }
  func.func @transform_1(%arg0: i32) -> (i32, i32, i32, i32) {
    %c0_i32 = arith.constant 0 : i32
    %c0_i32_0 = arith.constant 0 : i32
    %c0_i32_1 = arith.constant 0 : i32
    %c0_i32_2 = arith.constant 0 : i32
    return %arg0, %c0_i32, %c0_i32_0, %c0_i32_1 : i32, i32, i32, i32
  }
  func.func @transform_2(%arg0: i32) -> (i32, i32, i32, i32) {
    %c0_i32 = arith.constant 0 : i32
    %c0_i32_0 = arith.constant 0 : i32
    %c0_i32_1 = arith.constant 0 : i32
    %c0_i32_2 = arith.constant 0 : i32
    return %arg0, %c0_i32, %c0_i32_0, %c0_i32_1 : i32, i32, i32, i32
  }
  func.func @transform_3(%arg0: i32) -> (i32, i32, i32, i32) {
    %c0_i32 = arith.constant 0 : i32
    %c0_i32_0 = arith.constant 0 : i32
    %c0_i32_1 = arith.constant 0 : i32
    %c0_i32_2 = arith.constant 0 : i32
    %c0_i32_3 = arith.constant 0 : i32
    return %c0_i32, %c0_i32_0, %c0_i32_1, %c0_i32_2 : i32, i32, i32, i32
  }
  func.func @transform_4(%arg0: i32) -> (i32, i32, i32, i32) {
    %c0_i32 = arith.constant 0 : i32
    %c0_i32_0 = arith.constant 0 : i32
    %c0_i32_1 = arith.constant 0 : i32
    %c0_i32_2 = arith.constant 0 : i32
    return %arg0, %c0_i32, %c0_i32_0, %c0_i32_1 : i32, i32, i32, i32
  }
  func.func @transform_5(%arg0: i32) -> (i32, i32, i32, i32) {
    %c0_i32 = arith.constant 0 : i32
    %c0_i32_0 = arith.constant 0 : i32
    %c0_i32_1 = arith.constant 0 : i32
    %c0_i32_2 = arith.constant 0 : i32
    return %arg0, %c0_i32, %c0_i32_0, %c0_i32_1 : i32, i32, i32, i32
  }
}

module attributes {stable_mosaic.version = 11 : i64} {
  func.func @_ffn_kernel(%arg0: i32, %arg1: i32, %arg2: memref<16x32xbf16, #tpu.memory_space<vmem>>, %arg3: memref<32x64xbf16, #tpu.memory_space<vmem>>, %arg4: memref<64x32xbf16, #tpu.memory_space<vmem>>, %arg5: memref<16x32xf32, #tpu.memory_space<vmem>>, %arg6: memref<16x32xf32, #tpu.memory_space<vmem>>) attributes {dimension_semantics = [#tpu.dimension_semantics<parallel>, #tpu.dimension_semantics<arbitrary>], iteration_bounds = array<i64: 1, 1>, scalar_prefetch = 0 : i64, scratch_operands = 1 : i64, tpu.core_type = #tpu.core_type<tc>, window_params = [{transform_indices = @transform_0, window_bounds = array<i64: 16, 32>}, {transform_indices = @transform_1, window_bounds = array<i64: 32, 64>}, {transform_indices = @transform_2, window_bounds = array<i64: 64, 32>}, {transform_indices = @transform_3, window_bounds = array<i64: 16, 32>}]} {
    %c0_i32 = arith.constant 0 : i32
    %0 = arith.cmpi eq, %arg1, %c0_i32 : i32
    %1 = arith.extui %0 : i1 to i32
    %c0_i32_0 = arith.constant 0 : i32
    %2 = arith.cmpi ne, %1, %c0_i32_0 : i32
    scf.if %2 {
      %cst_14 = arith.constant 0.000000e+00 : f32
      %17 = vector.broadcast %cst_14 : f32 to vector<16x32xf32>
      %c0_15 = arith.constant 0 : index
      %c0_16 = arith.constant 0 : index
      %18 = vector.load %arg6[%c0_15, %c0_16] : memref<16x32xf32, #tpu.memory_space<vmem>>, vector<16x32xf32>
      tpu.vector_store %arg6[%c0_15, %c0_16], %17 {strides = array<i32>} : memref<16x32xf32, #tpu.memory_space<vmem>>, vector<16x32xf32>,
    } else {
    }
    %c0 = arith.constant 0 : index
    %c0_1 = arith.constant 0 : index
    %3 = vector.load %arg2[%c0, %c0_1] : memref<16x32xbf16, #tpu.memory_space<vmem>>, vector<16x32xbf16>
    %c0_2 = arith.constant 0 : index
    %c0_3 = arith.constant 0 : index
    %4 = vector.load %arg3[%c0_2, %c0_3] : memref<32x64xbf16, #tpu.memory_space<vmem>>, vector<32x64xbf16>
    %cst = arith.constant dense<0.000000e+00> : vector<16x64xf32>
    %5 = tpu.matmul %3, %4, %cst {dimension_numbers = #tpu.dot_dimension_numbers<[1], [0], [0], [1], [0, 0, 1, 1], [], []>} : vector<16x32xbf16>, vector<32x64xbf16>, vector<16x64xf32> -> vector<16x64xf32>
    %cst_4 = arith.constant 0.000000e+00 : f32
    %6 = vector.broadcast %cst_4 : f32 to vector<16x64xf32>
    %7 = arith.maximumf %5, %6 : vector<16x64xf32>
    %c0_5 = arith.constant 0 : index
    %c0_6 = arith.constant 0 : index
    %8 = vector.load %arg6[%c0_5, %c0_6] : memref<16x32xf32, #tpu.memory_space<vmem>>, vector<16x32xf32>
    %9 = arith.truncf %7 : vector<16x64xf32> to vector<16x64xbf16>
    %c0_7 = arith.constant 0 : index
    %c0_8 = arith.constant 0 : index
    %10 = vector.load %arg4[%c0_7, %c0_8] : memref<64x32xbf16, #tpu.memory_space<vmem>>, vector<64x32xbf16>
    %cst_9 = arith.constant dense<0.000000e+00> : vector<16x32xf32>
    %11 = tpu.matmul %9, %10, %cst_9 {dimension_numbers = #tpu.dot_dimension_numbers<[1], [0], [0], [1], [0, 0, 1, 1], [], []>} : vector<16x64xbf16>, vector<64x32xbf16>, vector<16x32xf32> -> vector<16x32xf32>
    %12 = arith.addf %8, %11 : vector<16x32xf32>
    %c0_10 = arith.constant 0 : index
    %c0_11 = arith.constant 0 : index
    %13 = vector.load %arg6[%c0_10, %c0_11] : memref<16x32xf32, #tpu.memory_space<vmem>>, vector<16x32xf32>
    tpu.vector_store %arg6[%c0_10, %c0_11], %12 {strides = array<i32>} : memref<16x32xf32, #tpu.memory_space<vmem>>, vector<16x32xf32>,
    %c0_i32_12 = arith.constant 0 : i32
    %14 = arith.cmpi eq, %arg1, %c0_i32_12 : i32
    %15 = arith.extui %14 : i1 to i32
    %c0_i32_13 = arith.constant 0 : i32
    %16 = arith.cmpi ne, %15, %c0_i32_13 : i32
    scf.if %16 {
      %c0_14 = arith.constant 0 : index
      %c0_15 = arith.constant 0 : index
      %17 = vector.load %arg6[%c0_14, %c0_15] : memref<16x32xf32, #tpu.memory_space<vmem>>, vector<16x32xf32>
      %c0_16 = arith.constant 0 : index
      %c0_17 = arith.constant 0 : index
      %18 = vector.load %arg5[%c0_16, %c0_17] : memref<16x32xf32, #tpu.memory_space<vmem>>, vector<16x32xf32>
      tpu.vector_store %arg5[%c0_16, %c0_17], %17 {strides = array<i32>} : memref<16x32xf32, #tpu.memory_space<vmem>>, vector<16x32xf32>,
    } else {
    }
    return
  }
  func.func @transform_0(%arg0: i32, %arg1: i32) -> (i32, i32) {
    %c0_i32 = arith.constant 0 : i32
    %c0_i32_0 = arith.constant 0 : i32
    return %arg0, %c0_i32 : i32, i32
  }
  func.func @transform_1(%arg0: i32, %arg1: i32) -> (i32, i32) {
    %c0_i32 = arith.constant 0 : i32
    %c0_i32_0 = arith.constant 0 : i32
    return %c0_i32, %arg1 : i32, i32
  }
  func.func @transform_2(%arg0: i32, %arg1: i32) -> (i32, i32) {
    %c0_i32 = arith.constant 0 : i32
    %c0_i32_0 = arith.constant 0 : i32
    return %arg1, %c0_i32 : i32, i32
  }
  func.func @transform_3(%arg0: i32, %arg1: i32) -> (i32, i32) {
    %c0_i32 = arith.constant 0 : i32
    %c0_i32_0 = arith.constant 0 : i32
    return %arg0, %c0_i32 : i32, i32
  }
}

module attributes {stable_mosaic.version = 11 : i64} {
  func.func @_rmsnorm_kernel(%arg0: i32, %arg1: memref<16x32xf32, #tpu.memory_space<vmem>>, %arg2: memref<1x32xf32, #tpu.memory_space<vmem>>, %arg3: memref<16x32xf32, #tpu.memory_space<vmem>>) attributes {dimension_semantics = [#tpu.dimension_semantics<parallel>], iteration_bounds = array<i64: 1>, scalar_prefetch = 0 : i64, scratch_operands = 0 : i64, tpu.core_type = #tpu.core_type<tc>, window_params = [{transform_indices = @transform_0, window_bounds = array<i64: 16, 32>}, {pipeline_mode = #tpu.pipeline_mode<synchronous>, transform_indices = @transform_1, window_bounds = array<i64: 1, 32>}, {transform_indices = @transform_2, window_bounds = array<i64: 16, 32>}]} {
    %c0 = arith.constant 0 : index
    %c0_0 = arith.constant 0 : index
    %0 = vector.load %arg1[%c0, %c0_0] : memref<16x32xf32, #tpu.memory_space<vmem>>, vector<16x32xf32>
    %1 = arith.mulf %0, %0 : vector<16x32xf32>
    %cst = arith.constant dense<0.000000e+00> : vector<16xf32>
    %2 = vector.multi_reduction <add>, %1, %cst [1] : vector<16x32xf32> to vector<16xf32>
    %3 = vector.shape_cast %2 : vector<16xf32> to vector<16x1xf32>
    %cst_1 = arith.constant 3.200000e+01 : f32
    %4 = vector.broadcast %cst_1 : f32 to vector<16x1xf32>
    %5 = arith.divf %3, %4 : vector<16x1xf32>
    %cst_2 = arith.constant 9.99999997E-7 : f32
    %6 = vector.broadcast %cst_2 : f32 to vector<16x1xf32>
    %7 = arith.addf %5, %6 : vector<16x1xf32>
    %8 = math.rsqrt %7 : vector<16x1xf32>
    %9 = vector.broadcast %8 : vector<16x1xf32> to vector<16x32xf32>
    %10 = arith.mulf %0, %9 : vector<16x32xf32>
    %c0_3 = arith.constant 0 : index
    %c0_4 = arith.constant 0 : index
    %11 = vector.load %arg2[%c0_3, %c0_4] : memref<1x32xf32, #tpu.memory_space<vmem>>, vector<1x32xf32>
    %12 = vector.broadcast %11 : vector<1x32xf32> to vector<16x32xf32>
    %13 = arith.mulf %10, %12 : vector<16x32xf32>
    %c0_5 = arith.constant 0 : index
    %c0_6 = arith.constant 0 : index
    %14 = vector.load %arg3[%c0_5, %c0_6] : memref<16x32xf32, #tpu.memory_space<vmem>>, vector<16x32xf32>
    tpu.vector_store %arg3[%c0_5, %c0_6], %13 {strides = array<i32>} : memref<16x32xf32, #tpu.memory_space<vmem>>, vector<16x32xf32>,
    return
  }
  func.func @transform_0(%arg0: i32) -> (i32, i32) {
    %c0_i32 = arith.constant 0 : i32
    %c0_i32_0 = arith.constant 0 : i32
    return %arg0, %c0_i32 : i32, i32
  }
  func.func @transform_1(%arg0: i32) -> (i32, i32) {
    %c0_i32 = arith.constant 0 : i32
    %c0_i32_0 = arith.constant 0 : i32
    %c0_i32_1 = arith.constant 0 : i32
    return %c0_i32, %c0_i32_0 : i32, i32
  }
  func.func @transform_2(%arg0: i32) -> (i32, i32) {
    %c0_i32 = arith.constant 0 : i32
    %c0_i32_0 = arith.constant 0 : i32
    return %arg0, %c0_i32 : i32, i32
  }
}

</mosaic_0001>

<llo_original>
// kernel: _lambda_.49
$region0: #{_lambda_.49}
  #allocation0 [shape = 'u32[]', space=smem, size = 0x4, offset = 0x4, fixed_abs, tag = 'smem constant byte address 0x4 - core index']
  #allocation1 [shape = 'u32[144,128]{1,0:T(1,128)}', space=vmem, size = 0x12000, scoped, tag = 'internal scratch']
  %s0 = inlined_call_operand.vmem [shape: f32[16,32], index: 0, kind: input, shape index: {}]
  %s1 = inlined_call_operand.vmem [shape: f32[1,32], index: 1, kind: input, shape index: {}]
  %s2 = inlined_call_operand.vmem [shape: f32[16,32], index: 2, kind: output, shape index: {}]
  %s3 = sld [smem:[#allocation0]]
  $region18: #{_lambda_.49} parent=0
    _
  %s5 = ssub.s32 1, %s3
  %s6 = scalar_select 0, %s5, %s3
  // Predicated region
  $region2: #{_lambda_.49} parent=0 // pred_check
    _
  $region3: #{_lambda_.49} parent=0 // pred_check_branch
    %8 = sbr.rel (0) target = $region5
  $region4: #{_lambda_.49} parent=0 // pred_region
    _
  $region5: #{_lambda_.49} parent=0 // pred_fallthru
    _
  // Predicated region
  $region6: #{_lambda_.49} parent=0 // pred_check
    _
  $region7: #{_lambda_.49} parent=0 // pred_check_branch
    %10 = sbr.rel (0) target = $region9
  $region8: #{_lambda_.49} parent=0 // pred_region
    _
  $region9: #{_lambda_.49} parent=0 // pred_fallthru
    _
  %v11 = vld [vmem:[%s0] sm:$0xff]
  %v12 = vld [vmem:[%s0 + $0x8] sm:$0xff]
  %v13 = vmul.f32 %v11, %v11
  %v14 = vmul.f32 %v12, %v12
  %vm15 = vcmask 261120
  %v16 = vsel %vm15, %v13, 0.0
  %17 = vadd.xlane.f32.xlu0 %v16
  %v18 = vpop.xlane.xlu0 %17
  %v19 = vsel %vm15, %v14, 0.0
  %20 = vadd.xlane.f32.xlu0 %v19
  %v21 = vpop.xlane.xlu0 %20
  %v22 = vrcp.pop 32.0
  %v23 = vmul.f32 %v18, %v22
  %v24 = vmul.f32 %v21, %v22
  %v25 = vadd.f32 %v23, 1e-06
  %v26 = vadd.f32 %v24, 1e-06
  %v27 = vrsqrt.pop %v25
  %v28 = vrsqrt.pop %v26
  %v29 = vmul.f32 %v11, %v27
  %v30 = vmul.f32 %v12, %v28
  %v31 = vld [vmem:[%s1] sm:$0x1]
  %v33 = vlaneseq
  %v34 = vshrl.u32 %v33, 7
  %v35 = vsub.s32 0, %v34
  %v36 = vrot.slane %v31, %v35
  %v38 = vmul.f32 %v29, %v36
  %v39 = vmul.f32 %v30, %v36
  %40 = vst.msk [vmem:[%s2] sm:$0xff] %vm15, %v38
  %41 = vst.msk [vmem:[%s2 + $0x8] sm:$0xff] %vm15, %v39
  // Predicated region
  $region10: #{_lambda_.49} parent=0 // pred_check
    _
  $region11: #{_lambda_.49} parent=0 // pred_check_branch
    %43 = sbr.rel (0) target = $region13
  $region12: #{_lambda_.49} parent=0 // pred_region
    _
  $region13: #{_lambda_.49} parent=0 // pred_fallthru
    _
  // Predicated region
  $region14: #{_lambda_.49} parent=0 // pred_check
    _
  $region15: #{_lambda_.49} parent=0 // pred_check_branch
    %45 = sbr.rel (0) target = $region17
  $region16: #{_lambda_.49} parent=0 // pred_region
    _
  $region17: #{_lambda_.49} parent=0 // pred_fallthru
    _

// kernel: _lambda_.50
$region0: #{_lambda_.50}
  #allocation0 [shape = 'u32[]', space=smem, size = 0x4, offset = 0x4, fixed_abs, tag = 'smem constant byte address 0x4 - core index']
  #allocation1 [shape = 'u32[144,128]{1,0:T(1,128)}', space=vmem, size = 0x12000, scoped, tag = 'internal scratch']
  #allocation2 [shape = 'f32[16,128]{1,0:T(8,128)}', space=vmem, size = 0x2000, scoped, tag = 'scratch operand']
  %s0 = inlined_call_operand.vmem [shape: bf16[16,128], index: 0, kind: input, shape index: {}]
  %s1 = inlined_call_operand.vmem [shape: bf16[128,128], index: 1, kind: input, shape index: {}]
  %s2 = inlined_call_operand.vmem [shape: f32[16,128], index: 2, kind: output, shape index: {}]
  %s3 = sld [smem:[#allocation0]]
  $region26: #{_lambda_.50} parent=0
    _
  %s5 = ssub.s32 1, %s3
  %s6 = scalar_select 0, %s5, %s3
  // Predicated region
  $region2: #{_lambda_.50} parent=0 // pred_check
    _
  $region3: #{_lambda_.50} parent=0 // pred_check_branch
    %8 = sbr.rel (0) target = $region5
  $region4: #{_lambda_.50} parent=0 // pred_region
    _
  $region5: #{_lambda_.50} parent=0 // pred_fallthru
    _
  // Predicated region
  $region6: #{_lambda_.50} parent=0 // pred_check
    _
  $region7: #{_lambda_.50} parent=0 // pred_check_branch
    %10 = sbr.rel (0) target = $region9
  $region8: #{_lambda_.50} parent=0 // pred_region
    _
  $region9: #{_lambda_.50} parent=0 // pred_fallthru
    _
  %p12 = scmp.eq.s32.totalorder 0, 0
  // Predicated region
  $region10: #{_lambda_.50} parent=0 // pred_check
    %p13 = pneg %p12
  $region11: #{_lambda_.50} parent=0 // pred_check_branch
    %15 = sbr.rel (%p13) target = $region13
  $region12: #{_lambda_.50} parent=0 // pred_region
    %16 = vst [vmem:[#allocation2] sm:$0xff] 0.0
    %17 = vst [vmem:[#allocation2 + $0x8] sm:$0xff] 0.0
  $region13: #{_lambda_.50} parent=0 // pred_fallthru
    _
  %v18 = vld [vmem:[#allocation2] sm:$0xff]
  %v19 = vld [vmem:[#allocation2 + $0x8] sm:$0xff]
  %v20 = vld [vmem:[%s0] sm:$0xf]
  %v21 = vld [vmem:[%s0 + $0x4] sm:$0xf]
  %v22 = vld [vmem:[%s1] sm:$0xf]
  %v23 = vld [vmem:[%s1 + $0x4] sm:$0xf]
  %v24 = vld [vmem:[%s1 + $0x8] sm:$0xf]
  %v25 = vld [vmem:[%s1 + $0xc] sm:$0xf]
  %v26 = vld [vmem:[%s1 + $0x10] sm:$0xf]
  %v27 = vld [vmem:[%s1 + $0x14] sm:$0xf]
  %v28 = vld [vmem:[%s1 + $0x18] sm:$0xf]
  %v29 = vld [vmem:[%s1 + $0x1c] sm:$0xf]
  %v30 = vld [vmem:[%s1 + $0x20] sm:$0xf]
  %v31 = vld [vmem:[%s1 + $0x24] sm:$0xf]
  %v32 = vld [vmem:[%s1 + $0x28] sm:$0xf]
  %v33 = vld [vmem:[%s1 + $0x2c] sm:$0xf]
  %v34 = vld [vmem:[%s1 + $0x30] sm:$0xf]
  %v35 = vld [vmem:[%s1 + $0x34] sm:$0xf]
  %v36 = vld [vmem:[%s1 + $0x38] sm:$0xf]
  %v37 = vld [vmem:[%s1 + $0x3c] sm:$0xf]
  %v40 = vunpack.c.l.b16 %v20
  %v41 = vunpack.c.l.b16 %v21
  %v42 = vpack.c.b16 %v41, %v40
  %v60 = vunpack.c.l.b16 %v22
  %v61 = vunpack.c.l.b16 %v23
  %v62 = vunpack.c.l.b16 %v24
  %v63 = vunpack.c.l.b16 %v25
  %v64 = vunpack.c.l.b16 %v26
  %v65 = vunpack.c.l.b16 %v27
  %v66 = vunpack.c.l.b16 %v28
  %v67 = vunpack.c.l.b16 %v29
  %v68 = vunpack.c.l.b16 %v30
  %v69 = vunpack.c.l.b16 %v31
  %v70 = vunpack.c.l.b16 %v32
  %v71 = vunpack.c.l.b16 %v33
  %v72 = vunpack.c.l.b16 %v34
  %v73 = vunpack.c.l.b16 %v35
  %v74 = vunpack.c.l.b16 %v36
  %v75 = vunpack.c.l.b16 %v37
  %v76 = vpack.c.b16 %v61, %v60
  %v77 = vpack.c.b16 %v63, %v62
  %v78 = vpack.c.b16 %v65, %v64
  %v79 = vpack.c.b16 %v67, %v66
  %v80 = vpack.c.b16 %v69, %v68
  %v81 = vpack.c.b16 %v71, %v70
  %v82 = vpack.c.b16 %v73, %v72
  %v83 = vpack.c.b16 %v75, %v74
  %92 = vmatprep.subr.bf16.mxu0 0
  %93 = vmatpush1.bf16.msra.mxu0 %v83
  %94 = vmatprep.subr.bf16.mxu0 0
  %95 = vmatpush1.bf16.msra.mxu0 %v82
  %96 = vmatprep.subr.bf16.mxu0 0
  %97 = vmatpush1.bf16.msra.mxu0 %v81
  %98 = vmatprep.subr.bf16.mxu0 0
  %99 = vmatpush1.bf16.msra.mxu0 %v80
  %100 = vmatprep.subr.bf16.mxu0 0
  %101 = vmatpush1.bf16.msra.mxu0 %v79
  %102 = vmatprep.subr.bf16.mxu0 0
  %103 = vmatpush1.bf16.msra.mxu0 %v78
  %104 = vmatprep.subr.bf16.mxu0 0
  %105 = vmatpush1.bf16.msra.mxu0 %v77
  %106 = vmatprep.subr.bf16.mxu0 0
  %107 = vmatpush1.bf16.msra.mxu0 %v76
  %108 = vmatprep.subr.bf16.mxu0 0
  %109 = vmatpush2.bf16.msra.mxu0 0
  %110 = vmatprep.subr.bf16.mxu0 0
  %111 = vmatpush2.bf16.msra.mxu0 0
  %112 = vmatprep.subr.bf16.mxu0 0
  %113 = vmatpush2.bf16.msra.mxu0 0
  %114 = vmatprep.subr.bf16.mxu0 0
  %115 = vmatpush2.bf16.msra.mxu0 0
  %116 = vmatprep.subr.bf16.mxu0 0
  %117 = vmatpush2.bf16.msra.mxu0 0
  %118 = vmatprep.subr.bf16.mxu0 0
  %119 = vmatpush2.bf16.msra.mxu0 0
  %120 = vmatprep.subr.bf16.mxu0 0
  %121 = vmatpush2.bf16.msra.mxu0 0
  %122 = vmatprep.subr.bf16.mxu0 0
  %123 = vmatpush2.bf16.msra.mxu0 0
  %124 = vmatprep.mubr.bf16.mxu0 0
  %125 = vmatmul.mubr.bf16.gmra.mxu0 %v42
  %v126 = vpop.f32.mrf.mxu0
  %v127 = vadd.f32 0.0, %v126
  %v128 = vpop.f32.mrf.mxu0
  %v129 = vpop.f32.mrf.mxu0
  %v130 = vadd.f32 0.0, %v129
  %v131 = vpop.f32.mrf.mxu0
  %132 = vdwg.mxu0
  %v133 = vadd.f32 %v18, %v127
  %v134 = vadd.f32 %v19, %v130
  %135 = vst [vmem:[#allocation2] sm:$0xff] %v133
  %136 = vst [vmem:[#allocation2 + $0x8] sm:$0xff] %v134
  // Predicated region
  $region14: #{_lambda_.50} parent=0 // pred_check
    %p137 = pneg %p12
  $region15: #{_lambda_.50} parent=0 // pred_check_branch
    %139 = sbr.rel (%p137) target = $region17
  $region16: #{_lambda_.50} parent=0 // pred_region
    %v140 = vld [vmem:[#allocation2] sm:$0xff]
    %v141 = vld [vmem:[#allocation2 + $0x8] sm:$0xff]
    %142 = vst [vmem:[%s2] sm:$0xff] %v140
    %143 = vst [vmem:[%s2 + $0x8] sm:$0xff] %v141
  $region17: #{_lambda_.50} parent=0 // pred_fallthru
    _
  // Predicated region
  $region18: #{_lambda_.50} parent=0 // pred_check
    _
  $region19: #{_lambda_.50} parent=0 // pred_check_branch
    %145 = sbr.rel (0) target = $region21
  $region20: #{_lambda_.50} parent=0 // pred_region
    _
  $region21: #{_lambda_.50} parent=0 // pred_fallthru
    _
  // Predicated region
  $region22: #{_lambda_.50} parent=0 // pred_check
    _
  $region23: #{_lambda_.50} parent=0 // pred_check_branch
    %147 = sbr.rel (0) target = $region25
  $region24: #{_lambda_.50} parent=0 // pred_region
    _
  $region25: #{_lambda_.50} parent=0 // pred_fallthru
    _

// kernel: _lambda_.51
$region0: #{_lambda_.51}
  #allocation0 [shape = 'u32[]', space=smem, size = 0x4, offset = 0x4, fixed_abs, tag = 'smem constant byte address 0x4 - core index']
  #allocation1 [shape = 'u32[144,128]{1,0:T(1,128)}', space=vmem, size = 0x12000, scoped, tag = 'internal scratch']
  %s0 = inlined_call_operand.vmem [shape: bf16[2,4,8,8], index: 0, kind: input, shape index: {}]
  %s1 = inlined_call_operand.vmem [shape: bf16[2,4,8,8], index: 1, kind: input, shape index: {}]
  %s2 = inlined_call_operand.vmem [shape: bf16[2,4,8,8], index: 2, kind: input, shape index: {}]
  %s3 = inlined_call_operand.vmem [shape: f32[1,4,8,8], index: 3, kind: input, shape index: {}]
  %s4 = inlined_call_operand.vmem [shape: f32[2,1,1,8], index: 4, kind: input, shape index: {}]
  %s5 = inlined_call_operand.vmem [shape: f32[2,4,8,8], index: 5, kind: output, shape index: {}]
  %s6 = sld [smem:[#allocation0]]
  $region53: #{_lambda_.51} parent=0
    _
  %s8 = ssub.s32 1, %s6
  %s9 = scalar_select 0, %s8, %s6
  loop: start=0, step=1, limit=4
  $region2: #{_lambda_.51} parent=0 // loop_pre_header
    _
  $region3: #{_lambda_.51} parent=0 // loop_header
    %s11 = sphi 0, %s15
    %p12 = scmp.ge.s32.totalorder %s11, 4
    %s21 = sphi 0, %s23
    %s24 = sphi 0, %s21
    %s25 = sphi 0, %s24
    %s41 = sphi 0, %s25
    %s47 = sphi 0, %s49
    %s50 = sphi 0, %s47
    %s51 = sphi 0, %s50
    %s67 = sphi 0, %s51
    %s73 = sphi 0, %s75
    %s76 = sphi 0, %s73
    %s77 = sphi 0, %s76
    %s93 = sphi 0, %s77
    %s97 = sphi 0, %s97
    %s99 = sphi 0, %s97
    %s100 = sphi 0, %s99
    %s114 = sphi 0, %s100
    %s120 = sphi 0, %s122
    %s123 = sphi 0, %s120
    %s124 = sphi 0, %s123
    %s140 = sphi 0, %s124
    %s146 = sphi 0, %s148
    %s149 = sphi 0, %s146
    %s150 = sphi 0, %s149
    %s166 = sphi 0, %s150
  $region4: #{_lambda_.51} parent=0 // loop_header_branch
    %14 = sbr.rel (%p12) target = $region8
  $region5: #{_lambda_.51} parent=0 // loop_body
    %s16 = ssub.s32 %s11, 1
    %s17 = ssub.s32 %s11, 2
    %s18 = sadd.s32 %s11, 1
    %s19 = ssub.s32 %s11, %s18
    %p20 = scmp.eq.s32.totalorder %s19, 0
    %s22 = sadd.s32 %s21, 1
    %s23 = scalar_select %p20, %s21, %s22
    %p26 = pneg %p20
    %p27 = scmp.eq.s32.totalorder %s11, 1
    %p28 = por %p26, %p27
    %p29 = scmp.ne.s32.totalorder %s21, %s24
    %p30 = scmp.eq.s32.totalorder %s11, 0
    %p31 = por %p29, %p30
    %p32 = scmp.ne.s32.totalorder %s21, %s24
    %p33 = scmp.eq.s32.totalorder %s16, 1
    %p34 = por %p32, %p33
    %p35 = scmp.ne.s32.totalorder %s24, %s25
    %p36 = scmp.eq.s32.totalorder %s16, 0
    %p37 = por %p35, %p36
    %p38 = scmp.ne.s32.totalorder %s24, %s25
    %p39 = scmp.eq.s32.totalorder %s17, 1
    %p40 = por %p38, %p39
    %p42 = scmp.ne.s32.totalorder %s25, %s41
    %p43 = scmp.eq.s32.totalorder %s17, 0
    %p44 = por %p42, %p43
    %s45 = ssub.s32 %s11, %s18
    %p46 = scmp.eq.s32.totalorder %s45, 0
    %s48 = sadd.s32 %s47, 1
    %s49 = scalar_select %p46, %s47, %s48
    %p52 = pneg %p46
    %p53 = scmp.eq.s32.totalorder %s11, 1
    %p54 = por %p52, %p53
    %p55 = scmp.ne.s32.totalorder %s47, %s50
    %p56 = scmp.eq.s32.totalorder %s11, 0
    %p57 = por %p55, %p56
    %p58 = scmp.ne.s32.totalorder %s47, %s50
    %p59 = scmp.eq.s32.totalorder %s16, 1
    %p60 = por %p58, %p59
    %p61 = scmp.ne.s32.totalorder %s50, %s51
    %p62 = scmp.eq.s32.totalorder %s16, 0
    %p63 = por %p61, %p62
    %p64 = scmp.ne.s32.totalorder %s50, %s51
    %p65 = scmp.eq.s32.totalorder %s17, 1
    %p66 = por %p64, %p65
    %p68 = scmp.ne.s32.totalorder %s51, %s67
    %p69 = scmp.eq.s32.totalorder %s17, 0
    %p70 = por %p68, %p69
    %s71 = ssub.s32 %s11, %s18
    %p72 = scmp.eq.s32.totalorder %s71, 0
    %s74 = sadd.s32 %s73, 1
    %s75 = scalar_select %p72, %s73, %s74
    %p78 = pneg %p72
    %p79 = scmp.eq.s32.totalorder %s11, 1
    %p80 = por %p78, %p79
    %p81 = scmp.ne.s32.totalorder %s73, %s76
    %p82 = scmp.eq.s32.totalorder %s11, 0
    %p83 = por %p81, %p82
    %p84 = scmp.ne.s32.totalorder %s73, %s76
    %p85 = scmp.eq.s32.totalorder %s16, 1
    %p86 = por %p84, %p85
    %p87 = scmp.ne.s32.totalorder %s76, %s77
    %p88 = scmp.eq.s32.totalorder %s16, 0
    %p89 = por %p87, %p88
    %p90 = scmp.ne.s32.totalorder %s76, %s77
    %p91 = scmp.eq.s32.totalorder %s17, 1
    %p92 = por %p90, %p91
    %p94 = scmp.ne.s32.totalorder %s77, %s93
    %p95 = scmp.eq.s32.totalorder %s17, 0
    %p96 = por %p94, %p95
    %s98 = sadd.s32 %s97, 1
    %p101 = scmp.eq.s32.totalorder %s11, 1
    %p102 = scmp.ne.s32.totalorder %s97, %s99
    %p103 = scmp.eq.s32.totalorder %s11, 0
    %p104 = por %p102, %p103
    %p105 = scmp.ne.s32.totalorder %s97, %s99
    %p106 = scmp.eq.s32.totalorder %s16, 1
    %p107 = por %p105, %p106
    %p108 = scmp.ne.s32.totalorder %s99, %s100
    %p109 = scmp.eq.s32.totalorder %s16, 0
    %p110 = por %p108, %p109
    %p111 = scmp.ne.s32.totalorder %s99, %s100
    %p112 = scmp.eq.s32.totalorder %s17, 1
    %p113 = por %p111, %p112
    %p115 = scmp.ne.s32.totalorder %s100, %s114
    %p116 = scmp.eq.s32.totalorder %s17, 0
    %p117 = por %p115, %p116
    %s118 = ssub.s32 %s11, %s18
    %p119 = scmp.eq.s32.totalorder %s118, 0
    %s121 = sadd.s32 %s120, 1
    %s122 = scalar_select %p119, %s120, %s121
    %p125 = pneg %p119
    %p126 = scmp.eq.s32.totalorder %s11, 1
    %p127 = por %p125, %p126
    %p128 = scmp.ne.s32.totalorder %s120, %s123
    %p129 = scmp.eq.s32.totalorder %s11, 0
    %p130 = por %p128, %p129
    %p131 = scmp.ne.s32.totalorder %s120, %s123
    %p132 = scmp.eq.s32.totalorder %s16, 1
    %p133 = por %p131, %p132
    %p134 = scmp.ne.s32.totalorder %s123, %s124
    %p135 = scmp.eq.s32.totalorder %s16, 0
    %p136 = por %p134, %p135
    %p137 = scmp.ne.s32.totalorder %s123, %s124
    %p138 = scmp.eq.s32.totalorder %s17, 1
    %p139 = por %p137, %p138
    %p141 = scmp.ne.s32.totalorder %s124, %s140
    %p142 = scmp.eq.s32.totalorder %s17, 0
    %p143 = por %p141, %p142
    %s144 = ssub.s32 %s11, %s18
    %p145 = scmp.eq.s32.totalorder %s144, 0
    %s147 = sadd.s32 %s146, 1
    %s148 = scalar_select %p145, %s146, %s147
    %p151 = pneg %p145
    %p152 = scmp.eq.s32.totalorder %s11, 1
    %p153 = por %p151, %p152
    %p154 = scmp.ne.s32.totalorder %s146, %s149
    %p155 = scmp.eq.s32.totalorder %s11, 0
    %p156 = por %p154, %p155
    %p157 = scmp.ne.s32.totalorder %s146, %s149
    %p158 = scmp.eq.s32.totalorder %s16, 1
    %p159 = por %p157, %p158
    %p160 = scmp.ne.s32.totalorder %s149, %s150
    %p161 = scmp.eq.s32.totalorder %s16, 0
    %p162 = por %p160, %p161
    %p163 = scmp.ne.s32.totalorder %s149, %s150
    %p164 = scmp.eq.s32.totalorder %s17, 1
    %p165 = por %p163, %p164
    %p167 = scmp.ne.s32.totalorder %s150, %s166
    %p168 = scmp.eq.s32.totalorder %s17, 0
    %p169 = por %p167, %p168
    %p170 = scmp.le.s32.totalorder 1, %s11
    %p171 = scmp.lt.s32.totalorder %s11, 3
    %p172 = pnand %p170, %p171
    %p173 = pneg %p172
    // Predicated region
    $region9: #{_lambda_.51} parent=5 // pred_check
      _
    $region10: #{_lambda_.51} parent=5 // pred_check_branch
      %175 = sbr.rel (%p172) target = $region12
    $region11: #{_lambda_.51} parent=5 // pred_region
      %s176 = ssub.s32 %s11, 1
      // Predicated region
      $region13: #{_lambda_.51} parent=11 // pred_check
        %p177 = pneg %p110
      $region14: #{_lambda_.51} parent=11 // pred_check_branch
        %179 = sbr.rel (%p177) target = $region16
      $region15: #{_lambda_.51} parent=11 // pred_region
        _
      $region16: #{_lambda_.51} parent=11 // pred_fallthru
        _
    $region12: #{_lambda_.51} parent=5 // pred_fallthru
      _
    %p180 = scmp.lt.s32.totalorder %s11, 2
    // Predicated region
    $region17: #{_lambda_.51} parent=5 // pred_check
      %p181 = pneg %p180
    $region18: #{_lambda_.51} parent=5 // pred_check_branch
      %183 = sbr.rel (%p181) target = $region20
    $region19: #{_lambda_.51} parent=5 // pred_region
      // Predicated region
      $region21: #{_lambda_.51} parent=19 // pred_check
        %p184 = pneg %p31
      $region22: #{_lambda_.51} parent=19 // pred_check_branch
        %186 = sbr.rel (%p184) target = $region24
      $region23: #{_lambda_.51} parent=19 // pred_region
        %p187 = scmp.lt.s32.totalorder %s11, 1
        %s188 = scalar_select %p187, %s11, 1
        %s189 = smul.addr %s188, 4
        %s190 = smul.addr %s189, 4
        %s191 = scalar_lea.vmem %s0, %s190
      $region24: #{_lambda_.51} parent=19 // pred_fallthru
        _
      // Predicated region
      $region25: #{_lambda_.51} parent=19 // pred_check
        %p192 = pneg %p57
      $region26: #{_lambda_.51} parent=19 // pred_check_branch
        %194 = sbr.rel (%p192) target = $region28
      $region27: #{_lambda_.51} parent=19 // pred_region
        %p195 = scmp.lt.s32.totalorder %s11, 1
        %s196 = scalar_select %p195, %s11, 1
        %s197 = smul.addr %s196, 4
        %s198 = smul.addr %s197, 4
        %s199 = scalar_lea.vmem %s1, %s198
      $region28: #{_lambda_.51} parent=19 // pred_fallthru
        _
      // Predicated region
      $region29: #{_lambda_.51} parent=19 // pred_check
        %p200 = pneg %p83
      $region30: #{_lambda_.51} parent=19 // pred_check_branch
        %202 = sbr.rel (%p200) target = $region32
      $region31: #{_lambda_.51} parent=19 // pred_region
        %p203 = scmp.lt.s32.totalorder %s11, 1
        %s204 = scalar_select %p203, %s11, 1
        %s205 = smul.addr %s204, 4
        %s206 = smul.addr %s205, 4
        %s207 = scalar_lea.vmem %s2, %s206
      $region32: #{_lambda_.51} parent=19 // pred_fallthru
        _
      // Predicated region
      $region33: #{_lambda_.51} parent=19 // pred_check
        %p208 = pneg %p130
      $region34: #{_lambda_.51} parent=19 // pred_check_branch
        %210 = sbr.rel (%p208) target = $region36
      $region35: #{_lambda_.51} parent=19 // pred_region
        %p211 = scmp.lt.s32.totalorder %s11, 1
        %s212 = scalar_select %p211, %s11, 1
        %s213 = scalar_lea.vmem %s4, %s212
      $region36: #{_lambda_.51} parent=19 // pred_fallthru
        _
    $region20: #{_lambda_.51} parent=5 // pred_fallthru
      _
    %p214 = scmp.le.s32.totalorder 1, %s11
    %p215 = scmp.lt.s32.totalorder %s11, 3
    %p216 = pnand %p214, %p215
    %p217 = pneg %p216
    // Predicated region
    $region37: #{_lambda_.51} parent=5 // pred_check
      _
    $region38: #{_lambda_.51} parent=5 // pred_check_branch
      %219 = sbr.rel (%p216) target = $region40
    $region39: #{_lambda_.51} parent=5 // pred_region
      %s220 = ssub.s32 %s11, 1
      %p221 = scmp.lt.s32.totalorder %s16, 1
      %s222 = scalar_select %p221, %s16, 1
      %s223 = smul.addr %s222, 4
      %s224 = smul.addr %s223, 4
      %s225 = scalar_lea.vmem %s0, %s224
      %p226 = pneg %p37
      %p227 = pneg %p34
      %p228 = scmp.lt.s32.totalorder %s16, 1
      %s229 = scalar_select %p228, %s16, 1
      %s230 = smul.addr %s229, 4
      %s231 = smul.addr %s230, 4
      %s232 = scalar_lea.vmem %s1, %s231
      %p233 = pneg %p63
      %p234 = pneg %p60
      %p235 = scmp.lt.s32.totalorder %s16, 1
      %s236 = scalar_select %p235, %s16, 1
      %s237 = smul.addr %s236, 4
      %s238 = smul.addr %s237, 4
      %s239 = scalar_lea.vmem %s2, %s238
      %p240 = pneg %p89
      %p241 = pneg %p86
      %p242 = pneg %p110
      %p243 = pneg %p107
      %p244 = scmp.lt.s32.totalorder %s16, 1
      %s245 = scalar_select %p244, %s16, 1
      %s246 = scalar_lea.vmem %s4, %s245
      %p247 = pneg %p136
      %p248 = pneg %p133
      %p249 = pneg %p162
      %p250 = pneg %p159
      %p251 = scmp.lt.s32.totalorder %s16, 1
      %s252 = scalar_select %p251, %s16, 1
      %s253 = smul.addr %s252, 4
      %s254 = smul.addr %s253, 8
      %s255 = scalar_lea.vmem %s5, %s254
      %p256 = scmp.lt.s32.totalorder %s16, 1
      %s257 = scalar_select %p256, %s16, 1
      %s258 = smul.addr %s257, 4
      %s259 = smul.addr %s258, 4
      %s260 = scalar_lea.vmem %s0, %s259
      %p261 = scmp.lt.s32.totalorder %s16, 1
      %s262 = scalar_select %p261, %s16, 1
      %s263 = smul.addr %s262, 4
      %s264 = smul.addr %s263, 4
      %s265 = scalar_lea.vmem %s1, %s264
      %p266 = scmp.lt.s32.totalorder %s16, 1
      %s267 = scalar_select %p266, %s16, 1
      %s268 = smul.addr %s267, 4
      %s269 = smul.addr %s268, 4
      %s270 = scalar_lea.vmem %s2, %s269
      %p271 = scmp.lt.s32.totalorder %s16, 1
      %s272 = scalar_select %p271, %s16, 1
      %s273 = scalar_lea.vmem %s4, %s272
      %p274 = scmp.lt.s32.totalorder %s16, 1
      %s275 = scalar_select %p274, %s16, 1
      %s276 = smul.addr %s275, 4
      %s277 = smul.addr %s276, 8
      %s278 = scalar_lea.vmem %s5, %s277
      %v280 = vld [vmem:[%s260] sm:$0xf]
      %v281 = vld [vmem:[%s260 + $0x4] sm:$0xf]
      %v282 = vld [vmem:[%s260 + $0x8] sm:$0xf]
      %v283 = vld [vmem:[%s260 + $0xc] sm:$0xf]
      %v284 = vld [vmem:[%s265] sm:$0xf]
      %v285 = vld [vmem:[%s265 + $0x4] sm:$0xf]
      %v286 = vld [vmem:[%s265 + $0x8] sm:$0xf]
      %v287 = vld [vmem:[%s265 + $0xc] sm:$0xf]
      %v288 = vld [vmem:[%s270] sm:$0xf]
      %v289 = vld [vmem:[%s270 + $0x4] sm:$0xf]
      %v290 = vld [vmem:[%s270 + $0x8] sm:$0xf]
      %v291 = vld [vmem:[%s270 + $0xc] sm:$0xf]
      %v292 = vld [vmem:[%s3] sm:$0xff]
      %v293 = vld [vmem:[%s3 + $0x8] sm:$0xff]
      %v294 = vld [vmem:[%s3 + $0x10] sm:$0xff]
      %v295 = vld [vmem:[%s3 + $0x18] sm:$0xff]
      %v296 = vld [vmem:[%s273] sm:$0x1]
      %v298 = vlaneseq
      %v299 = vshrl.u32 %v298, 7
      %v300 = vsub.s32 0, %v299
      %v301 = vrot.slane %v296, %v300
      %v303 = vadd.f32 %v292, %v301
      %v304 = vadd.f32 %v293, %v301
      %v305 = vadd.f32 %v294, %v301
      %v306 = vadd.f32 %v295, %v301
      %vm307 = vcmask 64512
      %v309 = vsel %vm307, %v280, 0
      %v312 = vsel %vm307, %v284, 0
      %314 = vmatprep.subr.bf16.mxu0 0
      %315 = vmatpush1.bf16.xpose.msra.mxu0 0
      %316 = vmatprep.subr.bf16.mxu0 0
      %317 = vmatpush1.bf16.xpose.msra.mxu0 0
      %318 = vmatprep.subr.bf16.mxu0 0
      %319 = vmatpush1.bf16.xpose.msra.mxu0 0
      %320 = vmatprep.subr.bf16.mxu0 0
      %321 = vmatpush1.bf16.xpose.msra.mxu0 0
      %322 = vmatprep.subr.bf16.mxu0 0
      %323 = vmatpush1.bf16.xpose.msra.mxu0 0
      %324 = vmatprep.subr.bf16.mxu0 0
      %325 = vmatpush1.bf16.xpose.msra.mxu0 0
      %326 = vmatprep.subr.bf16.mxu0 0
      %327 = vmatpush1.bf16.xpose.msra.mxu0 0
      %328 = vmatprep.subr.bf16.mxu0 0
      %329 = vmatpush1.bf16.xpose.msra.mxu0 %v312
      %330 = vmatprep.subr.bf16.mxu0 0
      %331 = vmatpush2.bf16.xpose.msra.mxu0 0
      %332 = vmatprep.subr.bf16.mxu0 0
      %333 = vmatpush2.bf16.xpose.msra.mxu0 0
      %334 = vmatprep.subr.bf16.mxu0 0
      %335 = vmatpush2.bf16.xpose.msra.mxu0 0
      %336 = vmatprep.subr.bf16.mxu0 0
      %337 = vmatpush2.bf16.xpose.msra.mxu0 0
      %338 = vmatprep.subr.bf16.mxu0 0
      %339 = vmatpush2.bf16.xpose.msra.mxu0 0
      %340 = vmatprep.subr.bf16.mxu0 0
      %341 = vmatpush2.bf16.xpose.msra.mxu0 0
      %342 = vmatprep.subr.bf16.mxu0 0
      %343 = vmatpush2.bf16.xpose.msra.mxu0 0
      %344 = vmatprep.subr.bf16.mxu0 0
      %345 = vmatpush2.bf16.xpose.msra.mxu0 0
      %346 = vmatprep.mubr.bf16.mxu0 0
      %347 = vmatmul.mubr.bf16.gmra.mxu0 %v309
      %v348 = vpop.f32.mrf.mxu0
      %v349 = vadd.f32 %v303, %v348
      %v350 = vpop.f32.mrf.mxu0
      %v351 = vpop.f32.mrf.mxu0
      %v352 = vpop.f32.mrf.mxu0
      %353 = vdwg.mxu0
      %v355 = vsel %vm307, %v281, 0
      %v358 = vsel %vm307, %v285, 0
      %360 = vmatprep.subr.bf16.mxu0 0
      %361 = vmatpush1.bf16.xpose.msra.mxu0 0
      %362 = vmatprep.subr.bf16.mxu0 0
      %363 = vmatpush1.bf16.xpose.msra.mxu0 0
      %364 = vmatprep.subr.bf16.mxu0 0
      %365 = vmatpush1.bf16.xpose.msra.mxu0 0
      %366 = vmatprep.subr.bf16.mxu0 0
      %367 = vmatpush1.bf16.xpose.msra.mxu0 0
      %368 = vmatprep.subr.bf16.mxu0 0
      %369 = vmatpush1.bf16.xpose.msra.mxu0 0
      %370 = vmatprep.subr.bf16.mxu0 0
      %371 = vmatpush1.bf16.xpose.msra.mxu0 0
      %372 = vmatprep.subr.bf16.mxu0 0
      %373 = vmatpush1.bf16.xpose.msra.mxu0 0
      %374 = vmatprep.subr.bf16.mxu0 0
      %375 = vmatpush1.bf16.xpose.msra.mxu0 %v358
      %376 = vmatprep.subr.bf16.mxu0 0
      %377 = vmatpush2.bf16.xpose.msra.mxu0 0
      %378 = vmatprep.subr.bf16.mxu0 0
      %379 = vmatpush2.bf16.xpose.msra.mxu0 0
      %380 = vmatprep.subr.bf16.mxu0 0
      %381 = vmatpush2.bf16.xpose.msra.mxu0 0
      %382 = vmatprep.subr.bf16.mxu0 0
      %383 = vmatpush2.bf16.xpose.msra.mxu0 0
      %384 = vmatprep.subr.bf16.mxu0 0
      %385 = vmatpush2.bf16.xpose.msra.mxu0 0
      %386 = vmatprep.subr.bf16.mxu0 0
      %387 = vmatpush2.bf16.xpose.msra.mxu0 0
      %388 = vmatprep.subr.bf16.mxu0 0
      %389 = vmatpush2.bf16.xpose.msra.mxu0 0
      %390 = vmatprep.subr.bf16.mxu0 0
      %391 = vmatpush2.bf16.xpose.msra.mxu0 0
      %392 = vmatprep.mubr.bf16.mxu0 0
      %393 = vmatmul.mubr.bf16.gmra.mxu0 %v355
      %v394 = vpop.f32.mrf.mxu0
      %v395 = vadd.f32 %v304, %v394
      %v396 = vpop.f32.mrf.mxu0
      %v397 = vpop.f32.mrf.mxu0
      %v398 = vpop.f32.mrf.mxu0
      %399 = vdwg.mxu0
      %v401 = vsel %vm307, %v282, 0
      %v404 = vsel %vm307, %v286, 0
      %406 = vmatprep.subr.bf16.mxu0 0
      %407 = vmatpush1.bf16.xpose.msra.mxu0 0
      %408 = vmatprep.subr.bf16.mxu0 0
      %409 = vmatpush1.bf16.xpose.msra.mxu0 0
      %410 = vmatprep.subr.bf16.mxu0 0
      %411 = vmatpush1.bf16.xpose.msra.mxu0 0
      %412 = vmatprep.subr.bf16.mxu0 0
      %413 = vmatpush1.bf16.xpose.msra.mxu0 0
      %414 = vmatprep.subr.bf16.mxu0 0
      %415 = vmatpush1.bf16.xpose.msra.mxu0 0
      %416 = vmatprep.subr.bf16.mxu0 0
      %417 = vmatpush1.bf16.xpose.msra.mxu0 0
      %418 = vmatprep.subr.bf16.mxu0 0
      %419 = vmatpush1.bf16.xpose.msra.mxu0 0
      %420 = vmatprep.subr.bf16.mxu0 0
      %421 = vmatpush1.bf16.xpose.msra.mxu0 %v404
      %422 = vmatprep.subr.bf16.mxu0 0
      %423 = vmatpush2.bf16.xpose.msra.mxu0 0
      %424 = vmatprep.subr.bf16.mxu0 0
      %425 = vmatpush2.bf16.xpose.msra.mxu0 0
      %426 = vmatprep.subr.bf16.mxu0 0
      %427 = vmatpush2.bf16.xpose.msra.mxu0 0
      %428 = vmatprep.subr.bf16.mxu0 0
      %429 = vmatpush2.bf16.xpose.msra.mxu0 0
      %430 = vmatprep.subr.bf16.mxu0 0
      %431 = vmatpush2.bf16.xpose.msra.mxu0 0
      %432 = vmatprep.subr.bf16.mxu0 0
      %433 = vmatpush2.bf16.xpose.msra.mxu0 0
      %434 = vmatprep.subr.bf16.mxu0 0
      %435 = vmatpush2.bf16.xpose.msra.mxu0 0
      %436 = vmatprep.subr.bf16.mxu0 0
      %437 = vmatpush2.bf16.xpose.msra.mxu0 0
      %438 = vmatprep.mubr.bf16.mxu0 0
      %439 = vmatmul.mubr.bf16.gmra.mxu0 %v401
      %v440 = vpop.f32.mrf.mxu0
      %v441 = vadd.f32 %v305, %v440
      %v442 = vpop.f32.mrf.mxu0
      %v443 = vpop.f32.mrf.mxu0
      %v444 = vpop.f32.mrf.mxu0
      %445 = vdwg.mxu0
      %v447 = vsel %vm307, %v283, 0
      %v450 = vsel %vm307, %v287, 0
      %452 = vmatprep.subr.bf16.mxu0 0
      %453 = vmatpush1.bf16.xpose.msra.mxu0 0
      %454 = vmatprep.subr.bf16.mxu0 0
      %455 = vmatpush1.bf16.xpose.msra.mxu0 0
      %456 = vmatprep.subr.bf16.mxu0 0
      %457 = vmatpush1.bf16.xpose.msra.mxu0 0
      %458 = vmatprep.subr.bf16.mxu0 0
      %459 = vmatpush1.bf16.xpose.msra.mxu0 0
      %460 = vmatprep.subr.bf16.mxu0 0
      %461 = vmatpush1.bf16.xpose.msra.mxu0 0
      %462 = vmatprep.subr.bf16.mxu0 0
      %463 = vmatpush1.bf16.xpose.msra.mxu0 0
      %464 = vmatprep.subr.bf16.mxu0 0
      %465 = vmatpush1.bf16.xpose.msra.mxu0 0
      %466 = vmatprep.subr.bf16.mxu0 0
      %467 = vmatpush1.bf16.xpose.msra.mxu0 %v450
      %468 = vmatprep.subr.bf16.mxu0 0
      %469 = vmatpush2.bf16.xpose.msra.mxu0 0
      %470 = vmatprep.subr.bf16.mxu0 0
      %471 = vmatpush2.bf16.xpose.msra.mxu0 0
      %472 = vmatprep.subr.bf16.mxu0 0
      %473 = vmatpush2.bf16.xpose.msra.mxu0 0
      %474 = vmatprep.subr.bf16.mxu0 0
      %475 = vmatpush2.bf16.xpose.msra.mxu0 0
      %476 = vmatprep.subr.bf16.mxu0 0
      %477 = vmatpush2.bf16.xpose.msra.mxu0 0
      %478 = vmatprep.subr.bf16.mxu0 0
      %479 = vmatpush2.bf16.xpose.msra.mxu0 0
      %480 = vmatprep.subr.bf16.mxu0 0
      %481 = vmatpush2.bf16.xpose.msra.mxu0 0
      %482 = vmatprep.subr.bf16.mxu0 0
      %483 = vmatpush2.bf16.xpose.msra.mxu0 0
      %484 = vmatprep.mubr.bf16.mxu0 0
      %485 = vmatmul.mubr.bf16.gmra.mxu0 %v447
      %v486 = vpop.f32.mrf.mxu0
      %v487 = vadd.f32 %v306, %v486
      %v488 = vpop.f32.mrf.mxu0
      %v489 = vpop.f32.mrf.mxu0
      %v490 = vpop.f32.mrf.mxu0
      %491 = vdwg.mxu0
      %v492 = vsel %vm307, %v349, -inf
      %493 = vmax.xlane.f32.xlu0 %v492
      %v494 = vpop.xlane.xlu0 %493
      %v495 = vsel %vm307, %v395, -inf
      %496 = vmax.xlane.f32.xlu0 %v495
      %v497 = vpop.xlane.xlu0 %496
      %v498 = vsel %vm307, %v441, -inf
      %499 = vmax.xlane.f32.xlu0 %v498
      %v500 = vpop.xlane.xlu0 %499
      %v501 = vsel %vm307, %v487, -inf
      %502 = vmax.xlane.f32.xlu0 %v501
      %v503 = vpop.xlane.xlu0 %502
      %v504 = vsub.f32 %v349, %v494
      %v505 = vsub.f32 %v395, %v497
      %v506 = vsub.f32 %v441, %v500
      %v507 = vsub.f32 %v487, %v503
      %v508 = vmul.f32 %v504, 1.442695
      %v509 = vpow.pop %v508
      %v510 = vmul.f32 %v505, 1.442695
      %v511 = vpow.pop %v510
      %v512 = vmul.f32 %v506, 1.442695
      %v513 = vpow.pop %v512
      %v514 = vmul.f32 %v507, 1.442695
      %v515 = vpow.pop %v514
      %v516 = vsel %vm307, %v509, 0.0
      %517 = vadd.xlane.f32.xlu0 %v516
      %v518 = vpop.xlane.xlu0 %517
      %v519 = vsel %vm307, %v511, 0.0
      %520 = vadd.xlane.f32.xlu0 %v519
      %v521 = vpop.xlane.xlu0 %520
      %v522 = vsel %vm307, %v513, 0.0
      %523 = vadd.xlane.f32.xlu0 %v522
      %v524 = vpop.xlane.xlu0 %523
      %v525 = vsel %vm307, %v515, 0.0
      %526 = vadd.xlane.f32.xlu0 %v525
      %v527 = vpop.xlane.xlu0 %526
      %v528 = vmax.f32 %v518, 1e-20
      %v529 = vmax.f32 %v521, 1e-20
      %v530 = vmax.f32 %v524, 1e-20
      %v531 = vmax.f32 %v527, 1e-20
      %v532 = vrcp.pop %v528
      %v533 = vrcp.pop %v529
      %v534 = vrcp.pop %v530
      %v535 = vrcp.pop %v531
      %v536 = vmul.f32 %v509, %v532
      %v537 = vmul.f32 %v511, %v533
      %v538 = vmul.f32 %v513, %v534
      %v539 = vmul.f32 %v515, %v535
      %v540 = vpack.c.bf16 %v536, %v536
      %v541 = vpack.c.bf16 %v537, %v537
      %v542 = vpack.c.bf16 %v538, %v538
      %v543 = vpack.c.bf16 %v539, %v539
      %v545 = vsel %vm307, %v540, 0
      %vm547 = vcmask 1043456
      %v549 = vsel %vm547, %v288, 0
      %551 = vmatprep.subr.bf16.mxu0 0
      %552 = vmatpush1.bf16.msra.mxu0 0
      %553 = vmatprep.subr.bf16.mxu0 0
      %554 = vmatpush1.bf16.msra.mxu0 0
      %555 = vmatprep.subr.bf16.mxu0 0
      %556 = vmatpush1.bf16.msra.mxu0 0
      %557 = vmatprep.subr.bf16.mxu0 0
      %558 = vmatpush1.bf16.msra.mxu0 0
      %559 = vmatprep.subr.bf16.mxu0 0
      %560 = vmatpush1.bf16.msra.mxu0 0
      %561 = vmatprep.subr.bf16.mxu0 0
      %562 = vmatpush1.bf16.msra.mxu0 0
      %563 = vmatprep.subr.bf16.mxu0 0
      %564 = vmatpush1.bf16.msra.mxu0 0
      %565 = vmatprep.subr.bf16.mxu0 0
      %566 = vmatpush1.bf16.msra.mxu0 %v549
      %567 = vmatprep.subr.bf16.mxu0 0
      %568 = vmatpush2.bf16.msra.mxu0 0
      %569 = vmatprep.subr.bf16.mxu0 0
      %570 = vmatpush2.bf16.msra.mxu0 0
      %571 = vmatprep.subr.bf16.mxu0 0
      %572 = vmatpush2.bf16.msra.mxu0 0
      %573 = vmatprep.subr.bf16.mxu0 0
      %574 = vmatpush2.bf16.msra.mxu0 0
      %575 = vmatprep.subr.bf16.mxu0 0
      %576 = vmatpush2.bf16.msra.mxu0 0
      %577 = vmatprep.subr.bf16.mxu0 0
      %578 = vmatpush2.bf16.msra.mxu0 0
      %579 = vmatprep.subr.bf16.mxu0 0
      %580 = vmatpush2.bf16.msra.mxu0 0
      %581 = vmatprep.subr.bf16.mxu0 0
      %582 = vmatpush2.bf16.msra.mxu0 0
      %583 = vmatprep.mubr.bf16.mxu0 0
      %584 = vmatmul.mubr.bf16.gmra.mxu0 %v545
      %v585 = vpop.f32.mrf.mxu0
      %v586 = vadd.f32 0.0, %v585
      %v587 = vpop.f32.mrf.mxu0
      %v588 = vpop.f32.mrf.mxu0
      %v589 = vpop.f32.mrf.mxu0
      %590 = vdwg.mxu0
      %v592 = vsel %vm307, %v541, 0
      %v595 = vsel %vm547, %v289, 0
      %597 = vmatprep.subr.bf16.mxu0 0
      %598 = vmatpush1.bf16.msra.mxu0 0
      %599 = vmatprep.subr.bf16.mxu0 0
      %600 = vmatpush1.bf16.msra.mxu0 0
      %601 = vmatprep.subr.bf16.mxu0 0
      %602 = vmatpush1.bf16.msra.mxu0 0
      %603 = vmatprep.subr.bf16.mxu0 0
      %604 = vmatpush1.bf16.msra.mxu0 0
      %605 = vmatprep.subr.bf16.mxu0 0
      %606 = vmatpush1.bf16.msra.mxu0 0
      %607 = vmatprep.subr.bf16.mxu0 0
      %608 = vmatpush1.bf16.msra.mxu0 0
      %609 = vmatprep.subr.bf16.mxu0 0
      %610 = vmatpush1.bf16.msra.mxu0 0
      %611 = vmatprep.subr.bf16.mxu0 0
      %612 = vmatpush1.bf16.msra.mxu0 %v595
      %613 = vmatprep.subr.bf16.mxu0 0
      %614 = vmatpush2.bf16.msra.mxu0 0
      %615 = vmatprep.subr.bf16.mxu0 0
      %616 = vmatpush2.bf16.msra.mxu0 0
      %617 = vmatprep.subr.bf16.mxu0 0
      %618 = vmatpush2.bf16.msra.mxu0 0
      %619 = vmatprep.subr.bf16.mxu0 0
      %620 = vmatpush2.bf16.msra.mxu0 0
      %621 = vmatprep.subr.bf16.mxu0 0
      %622 = vmatpush2.bf16.msra.mxu0 0
      %623 = vmatprep.subr.bf16.mxu0 0
      %624 = vmatpush2.bf16.msra.mxu0 0
      %625 = vmatprep.subr.bf16.mxu0 0
      %626 = vmatpush2.bf16.msra.mxu0 0
      %627 = vmatprep.subr.bf16.mxu0 0
      %628 = vmatpush2.bf16.msra.mxu0 0
      %629 = vmatprep.mubr.bf16.mxu0 0
      %630 = vmatmul.mubr.bf16.gmra.mxu0 %v592
      %v631 = vpop.f32.mrf.mxu0
      %v632 = vadd.f32 0.0, %v631
      %v633 = vpop.f32.mrf.mxu0
      %v634 = vpop.f32.mrf.mxu0
      %v635 = vpop.f32.mrf.mxu0
      %636 = vdwg.mxu0
      %v638 = vsel %vm307, %v542, 0
      %v641 = vsel %vm547, %v290, 0
      %643 = vmatprep.subr.bf16.mxu0 0
      %644 = vmatpush1.bf16.msra.mxu0 0
      %645 = vmatprep.subr.bf16.mxu0 0
      %646 = vmatpush1.bf16.msra.mxu0 0
      %647 = vmatprep.subr.bf16.mxu0 0
      %648 = vmatpush1.bf16.msra.mxu0 0
      %649 = vmatprep.subr.bf16.mxu0 0
      %650 = vmatpush1.bf16.msra.mxu0 0
      %651 = vmatprep.subr.bf16.mxu0 0
      %652 = vmatpush1.bf16.msra.mxu0 0
      %653 = vmatprep.subr.bf16.mxu0 0
      %654 = vmatpush1.bf16.msra.mxu0 0
      %655 = vmatprep.subr.bf16.mxu0 0
      %656 = vmatpush1.bf16.msra.mxu0 0
      %657 = vmatprep.subr.bf16.mxu0 0
      %658 = vmatpush1.bf16.msra.mxu0 %v641
      %659 = vmatprep.subr.bf16.mxu0 0
      %660 = vmatpush2.bf16.msra.mxu0 0
      %661 = vmatprep.subr.bf16.mxu0 0
      %662 = vmatpush2.bf16.msra.mxu0 0
      %663 = vmatprep.subr.bf16.mxu0 0
      %664 = vmatpush2.bf16.msra.mxu0 0
      %665 = vmatprep.subr.bf16.mxu0 0
      %666 = vmatpush2.bf16.msra.mxu0 0
      %667 = vmatprep.subr.bf16.mxu0 0
      %668 = vmatpush2.bf16.msra.mxu0 0
      %669 = vmatprep.subr.bf16.mxu0 0
      %670 = vmatpush2.bf16.msra.mxu0 0
      %671 = vmatprep.subr.bf16.mxu0 0
      %672 = vmatpush2.bf16.msra.mxu0 0
      %673 = vmatprep.subr.bf16.mxu0 0
      %674 = vmatpush2.bf16.msra.mxu0 0
      %675 = vmatprep.mubr.bf16.mxu0 0
      %676 = vmatmul.mubr.bf16.gmra.mxu0 %v638
      %v677 = vpop.f32.mrf.mxu0
      %v678 = vadd.f32 0.0, %v677
      %v679 = vpop.f32.mrf.mxu0
      %v680 = vpop.f32.mrf.mxu0
      %v681 = vpop.f32.mrf.mxu0
      %682 = vdwg.mxu0
      %v684 = vsel %vm307, %v543, 0
      %v687 = vsel %vm547, %v291, 0
      %689 = vmatprep.subr.bf16.mxu0 0
      %690 = vmatpush1.bf16.msra.mxu0 0
      %691 = vmatprep.subr.bf16.mxu0 0
      %692 = vmatpush1.bf16.msra.mxu0 0
      %693 = vmatprep.subr.bf16.mxu0 0
      %694 = vmatpush1.bf16.msra.mxu0 0
      %695 = vmatprep.subr.bf16.mxu0 0
      %696 = vmatpush1.bf16.msra.mxu0 0
      %697 = vmatprep.subr.bf16.mxu0 0
      %698 = vmatpush1.bf16.msra.mxu0 0
      %699 = vmatprep.subr.bf16.mxu0 0
      %700 = vmatpush1.bf16.msra.mxu0 0
      %701 = vmatprep.subr.bf16.mxu0 0
      %702 = vmatpush1.bf16.msra.mxu0 0
      %703 = vmatprep.subr.bf16.mxu0 0
      %704 = vmatpush1.bf16.msra.mxu0 %v687
      %705 = vmatprep.subr.bf16.mxu0 0
      %706 = vmatpush2.bf16.msra.mxu0 0
      %707 = vmatprep.subr.bf16.mxu0 0
      %708 = vmatpush2.bf16.msra.mxu0 0
      %709 = vmatprep.subr.bf16.mxu0 0
      %710 = vmatpush2.bf16.msra.mxu0 0
      %711 = vmatprep.subr.bf16.mxu0 0
      %712 = vmatpush2.bf16.msra.mxu0 0
      %713 = vmatprep.subr.bf16.mxu0 0
      %714 = vmatpush2.bf16.msra.mxu0 0
      %715 = vmatprep.subr.bf16.mxu0 0
      %716 = vmatpush2.bf16.msra.mxu0 0
      %717 = vmatprep.subr.bf16.mxu0 0
      %718 = vmatpush2.bf16.msra.mxu0 0
      %719 = vmatprep.subr.bf16.mxu0 0
      %720 = vmatpush2.bf16.msra.mxu0 0
      %721 = vmatprep.mubr.bf16.mxu0 0
      %722 = vmatmul.mubr.bf16.gmra.mxu0 %v684
      %v723 = vpop.f32.mrf.mxu0
      %v724 = vadd.f32 0.0, %v723
      %v725 = vpop.f32.mrf.mxu0
      %v726 = vpop.f32.mrf.mxu0
      %v727 = vpop.f32.mrf.mxu0
      %728 = vdwg.mxu0
      %729 = vst.msk [vmem:[%s278] sm:$0xff] %vm307, %v586
      %730 = vst.msk [vmem:[%s278 + $0x8] sm:$0xff] %vm307, %v632
      %731 = vst.msk [vmem:[%s278 + $0x10] sm:$0xff] %vm307, %v678
      %732 = vst.msk [vmem:[%s278 + $0x18] sm:$0xff] %vm307, %v724
      %p733 = scmp.lt.s32.totalorder %s16, 1
      %s734 = scalar_select %p733, %s16, 1
      %s735 = smul.addr %s734, 4
      %s736 = smul.addr %s735, 8
      %s737 = scalar_lea.vmem %s5, %s736
      // Predicated region
      $region41: #{_lambda_.51} parent=39 // pred_check
        %p738 = pneg %p159
      $region42: #{_lambda_.51} parent=39 // pred_check_branch
        %740 = sbr.rel (%p738) target = $region44
      $region43: #{_lambda_.51} parent=39 // pred_region
        _
      $region44: #{_lambda_.51} parent=39 // pred_fallthru
        _
    $region40: #{_lambda_.51} parent=5 // pred_fallthru
      _
    %p741 = scmp.le.s32.totalorder 2, %s11
    // Predicated region
    $region45: #{_lambda_.51} parent=5 // pred_check
      %p742 = pneg %p741
    $region46: #{_lambda_.51} parent=5 // pred_check_branch
      %744 = sbr.rel (%p742) target = $region48
    $region47: #{_lambda_.51} parent=5 // pred_region
      %s745 = ssub.s32 %s11, 2
      // Predicated region
      $region49: #{_lambda_.51} parent=47 // pred_check
        %p746 = pneg %p165
      $region50: #{_lambda_.51} parent=47 // pred_check_branch
        %748 = sbr.rel (%p746) target = $region52
      $region51: #{_lambda_.51} parent=47 // pred_region
        %p749 = scmp.lt.s32.totalorder %s17, 1
        %s750 = scalar_select %p749, %s17, 1
        %s751 = smul.addr %s750, 4
        %s752 = smul.addr %s751, 8
        %s753 = scalar_lea.vmem %s5, %s752
      $region52: #{_lambda_.51} parent=47 // pred_fallthru
        _
    $region48: #{_lambda_.51} parent=5 // pred_fallthru
      _
  $region6: #{_lambda_.51} parent=0 // loop_footer
    %s15 = sadd.s32 1, %s11
  $region7: #{_lambda_.51} parent=0 // loop_footer_branch
    %10 = sbr.rel target = $region3
  $region8: #{_lambda_.51} parent=0 // loop_exit
    _

// kernel: _lambda_.41
$region0: #{_lambda_.41}
  #allocation0 [shape = 'u32[]', space=smem, size = 0x4, offset = 0x4, fixed_abs, tag = 'smem constant byte address 0x4 - core index']
  #allocation1 [shape = 'u32[144,128]{1,0:T(1,128)}', space=vmem, size = 0x12000, scoped, tag = 'internal scratch']
  #allocation2 [shape = 'f32[16,32]{1,0:T(8,128)}', space=vmem, size = 0x2000, scoped, tag = 'scratch operand']
  %s0 = inlined_call_operand.vmem [shape: bf16[16,32], index: 0, kind: input, shape index: {}]
  %s1 = inlined_call_operand.vmem [shape: bf16[32,64], index: 1, kind: input, shape index: {}]
  %s2 = inlined_call_operand.vmem [shape: bf16[64,32], index: 2, kind: input, shape index: {}]
  %s3 = inlined_call_operand.vmem [shape: f32[16,32], index: 3, kind: output, shape index: {}]
  %s4 = sld [smem:[#allocation0]]
  $region30: #{_lambda_.41} parent=0
    _
  %s6 = ssub.s32 1, %s4
  %s7 = scalar_select 0, %s6, %s4
  // Predicated region
  $region2: #{_lambda_.41} parent=0 // pred_check
    _
  $region3: #{_lambda_.41} parent=0 // pred_check_branch
    %9 = sbr.rel (0) target = $region5
  $region4: #{_lambda_.41} parent=0 // pred_region
    _
  $region5: #{_lambda_.41} parent=0 // pred_fallthru
    _
  // Predicated region
  $region6: #{_lambda_.41} parent=0 // pred_check
    _
  $region7: #{_lambda_.41} parent=0 // pred_check_branch
    %11 = sbr.rel (0) target = $region9
  $region8: #{_lambda_.41} parent=0 // pred_region
    _
  $region9: #{_lambda_.41} parent=0 // pred_fallthru
    _
  // Predicated region
  $region10: #{_lambda_.41} parent=0 // pred_check
    _
  $region11: #{_lambda_.41} parent=0 // pred_check_branch
    %13 = sbr.rel (0) target = $region13
  $region12: #{_lambda_.41} parent=0 // pred_region
    _
  $region13: #{_lambda_.41} parent=0 // pred_fallthru
    _
  %p15 = scmp.eq.s32.totalorder 0, 0
  // Predicated region
  $region14: #{_lambda_.41} parent=0 // pred_check
    %p16 = pneg %p15
  $region15: #{_lambda_.41} parent=0 // pred_check_branch
    %18 = sbr.rel (%p16) target = $region17
  $region16: #{_lambda_.41} parent=0 // pred_region
    %vm19 = vcmask 261120
    %20 = vst.msk [vmem:[#allocation2] sm:$0xff] %vm19, 0.0
    %21 = vst.msk [vmem:[#allocation2 + $0x8] sm:$0xff] %vm19, 0.0
  $region17: #{_lambda_.41} parent=0 // pred_fallthru
    _
  %v22 = vld [vmem:[%s0] sm:$0xf]
  %v23 = vld [vmem:[%s0 + $0x4] sm:$0xf]
  %v24 = vld [vmem:[%s1] sm:$0xf]
  %v25 = vld [vmem:[%s1 + $0x4] sm:$0xf]
  %v26 = vld [vmem:[%s1 + $0x8] sm:$0xf]
  %v27 = vld [vmem:[%s1 + $0xc] sm:$0xf]
  %v30 = vunpack.c.l.b16 %v22
  %v31 = vunpack.c.l.b16 %v23
  %v32 = vpack.c.b16 %v31, %v30
  %v37 = vunpack.c.l.b16 %v24
  %v38 = vunpack.c.l.b16 %v25
  %v39 = vunpack.c.l.b16 %v26
  %v40 = vunpack.c.l.b16 %v27
  %v41 = vpack.c.b16 %v38, %v37
  %v42 = vpack.c.b16 %v40, %v39
  %vm45 = vcmask 261120
  %v47 = vsel %vm45, %v32, 0
  %49 = vmatprep.subr.bf16.mxu0 0
  %50 = vmatpush1.bf16.msra.mxu0 0
  %51 = vmatprep.subr.bf16.mxu0 0
  %52 = vmatpush1.bf16.msra.mxu0 0
  %53 = vmatprep.subr.bf16.mxu0 0
  %54 = vmatpush1.bf16.msra.mxu0 0
  %55 = vmatprep.subr.bf16.mxu0 0
  %56 = vmatpush1.bf16.msra.mxu0 0
  %57 = vmatprep.subr.bf16.mxu0 0
  %58 = vmatpush1.bf16.msra.mxu0 0
  %59 = vmatprep.subr.bf16.mxu0 0
  %60 = vmatpush1.bf16.msra.mxu0 0
  %61 = vmatprep.subr.bf16.mxu0 0
  %62 = vmatpush1.bf16.msra.mxu0 %v42
  %63 = vmatprep.subr.bf16.mxu0 0
  %64 = vmatpush1.bf16.msra.mxu0 %v41
  %65 = vmatprep.subr.bf16.mxu0 0
  %66 = vmatpush2.bf16.msra.mxu0 0
  %67 = vmatprep.subr.bf16.mxu0 0
  %68 = vmatpush2.bf16.msra.mxu0 0
  %69 = vmatprep.subr.bf16.mxu0 0
  %70 = vmatpush2.bf16.msra.mxu0 0
  %71 = vmatprep.subr.bf16.mxu0 0
  %72 = vmatpush2.bf16.msra.mxu0 0
  %73 = vmatprep.subr.bf16.mxu0 0
  %74 = vmatpush2.bf16.msra.mxu0 0
  %75 = vmatprep.subr.bf16.mxu0 0
  %76 = vmatpush2.bf16.msra.mxu0 0
  %77 = vmatprep.subr.bf16.mxu0 0
  %78 = vmatpush2.bf16.msra.mxu0 0
  %79 = vmatprep.subr.bf16.mxu0 0
  %80 = vmatpush2.bf16.msra.mxu0 0
  %81 = vmatprep.mubr.bf16.mxu0 0
  %82 = vmatmul.mubr.bf16.gmra.mxu0 %v47
  %v83 = vpop.f32.mrf.mxu0
  %v84 = vadd.f32 0.0, %v83
  %v85 = vpop.f32.mrf.mxu0
  %v86 = vpop.f32.mrf.mxu0
  %v87 = vadd.f32 0.0, %v86
  %v88 = vpop.f32.mrf.mxu0
  %89 = vdwg.mxu0
  %v90 = vmax.f32 %v84, 0.0
  %v91 = vmax.f32 %v87, 0.0
  %v92 = vld [vmem:[#allocation2] sm:$0xff]
  %v93 = vld [vmem:[#allocation2 + $0x8] sm:$0xff]
  %v94 = vpack.c.bf16 %v91, %v90
  %v95 = vld [vmem:[%s2] sm:$0xf]
  %v96 = vld [vmem:[%s2 + $0x4] sm:$0xf]
  %v97 = vld [vmem:[%s2 + $0x8] sm:$0xf]
  %v98 = vld [vmem:[%s2 + $0xc] sm:$0xf]
  %v99 = vld [vmem:[%s2 + $0x10] sm:$0xf]
  %v100 = vld [vmem:[%s2 + $0x14] sm:$0xf]
  %v101 = vld [vmem:[%s2 + $0x18] sm:$0xf]
  %v102 = vld [vmem:[%s2 + $0x1c] sm:$0xf]
  %v111 = vunpack.c.l.b16 %v95
  %v112 = vunpack.c.l.b16 %v96
  %v113 = vunpack.c.l.b16 %v97
  %v114 = vunpack.c.l.b16 %v98
  %v115 = vunpack.c.l.b16 %v99
  %v116 = vunpack.c.l.b16 %v100
  %v117 = vunpack.c.l.b16 %v101
  %v118 = vunpack.c.l.b16 %v102
  %v119 = vpack.c.b16 %v112, %v111
  %v120 = vpack.c.b16 %v114, %v113
  %v121 = vpack.c.b16 %v116, %v115
  %v122 = vpack.c.b16 %v118, %v117
  %vm127 = vcmask 523264
  %v129 = vsel %vm127, %v94, 0
  %131 = vmatprep.subr.bf16.mxu0 0
  %132 = vmatpush1.bf16.msra.mxu0 0
  %133 = vmatprep.subr.bf16.mxu0 0
  %134 = vmatpush1.bf16.msra.mxu0 0
  %135 = vmatprep.subr.bf16.mxu0 0
  %136 = vmatpush1.bf16.msra.mxu0 0
  %137 = vmatprep.subr.bf16.mxu0 0
  %138 = vmatpush1.bf16.msra.mxu0 0
  %139 = vmatprep.subr.bf16.mxu0 0
  %140 = vmatpush1.bf16.msra.mxu0 %v122
  %141 = vmatprep.subr.bf16.mxu0 0
  %142 = vmatpush1.bf16.msra.mxu0 %v121
  %143 = vmatprep.subr.bf16.mxu0 0
  %144 = vmatpush1.bf16.msra.mxu0 %v120
  %145 = vmatprep.subr.bf16.mxu0 0
  %146 = vmatpush1.bf16.msra.mxu0 %v119
  %147 = vmatprep.subr.bf16.mxu0 0
  %148 = vmatpush2.bf16.msra.mxu0 0
  %149 = vmatprep.subr.bf16.mxu0 0
  %150 = vmatpush2.bf16.msra.mxu0 0
  %151 = vmatprep.subr.bf16.mxu0 0
  %152 = vmatpush2.bf16.msra.mxu0 0
  %153 = vmatprep.subr.bf16.mxu0 0
  %154 = vmatpush2.bf16.msra.mxu0 0
  %155 = vmatprep.subr.bf16.mxu0 0
  %156 = vmatpush2.bf16.msra.mxu0 0
  %157 = vmatprep.subr.bf16.mxu0 0
  %158 = vmatpush2.bf16.msra.mxu0 0
  %159 = vmatprep.subr.bf16.mxu0 0
  %160 = vmatpush2.bf16.msra.mxu0 0
  %161 = vmatprep.subr.bf16.mxu0 0
  %162 = vmatpush2.bf16.msra.mxu0 0
  %163 = vmatprep.mubr.bf16.mxu0 0
  %164 = vmatmul.mubr.bf16.gmra.mxu0 %v129
  %v165 = vpop.f32.mrf.mxu0
  %v166 = vadd.f32 0.0, %v165
  %v167 = vpop.f32.mrf.mxu0
  %v168 = vpop.f32.mrf.mxu0
  %v169 = vadd.f32 0.0, %v168
  %v170 = vpop.f32.mrf.mxu0
  %171 = vdwg.mxu0
  %v172 = vadd.f32 %v92, %v166
  %v173 = vadd.f32 %v93, %v169
  %174 = vst.msk [vmem:[#allocation2] sm:$0xff] %vm45, %v172
  %175 = vst.msk [vmem:[#allocation2 + $0x8] sm:$0xff] %vm45, %v173
  // Predicated region
  $region18: #{_lambda_.41} parent=0 // pred_check
    %p176 = pneg %p15
  $region19: #{_lambda_.41} parent=0 // pred_check_branch
    %178 = sbr.rel (%p176) target = $region21
  $region20: #{_lambda_.41} parent=0 // pred_region
    %v179 = vld [vmem:[#allocation2] sm:$0xff]
    %v180 = vld [vmem:[#allocation2 + $0x8] sm:$0xff]
    %181 = vst.msk [vmem:[%s3] sm:$0xff] %vm45, %v179
    %182 = vst.msk [vmem:[%s3 + $0x8] sm:$0xff] %vm45, %v180
  $region21: #{_lambda_.41} parent=0 // pred_fallthru
    _
  // Predicated region
  $region22: #{_lambda_.41} parent=0 // pred_check
    _
  $region23: #{_lambda_.41} parent=0 // pred_check_branch
    %184 = sbr.rel (0) target = $region25
  $region24: #{_lambda_.41} parent=0 // pred_region
    _
  $region25: #{_lambda_.41} parent=0 // pred_fallthru
    _
  // Predicated region
  $region26: #{_lambda_.41} parent=0 // pred_check
    _
  $region27: #{_lambda_.41} parent=0 // pred_check_branch
    %186 = sbr.rel (0) target = $region29
  $region28: #{_lambda_.41} parent=0 // pred_region
    _
  $region29: #{_lambda_.41} parent=0 // pred_fallthru
    _

// kernel: _lambda_.71
$region0: #{_lambda_.71}
  #allocation0 [shape = 'u32[]', space=smem, size = 0x4, offset = 0x4, fixed_abs, tag = 'smem constant byte address 0x4 - core index']
  #allocation1 [shape = 'u32[144,128]{1,0:T(1,128)}', space=vmem, size = 0x12000, scoped, tag = 'internal scratch']
  %s0 = inlined_call_operand.vmem [shape: f32[16,32], index: 0, kind: input, shape index: {}]
  %s1 = inlined_call_operand.vmem [shape: f32[1,32], index: 1, kind: input, shape index: {}]
  %s2 = inlined_call_operand.hbm [shape: f32[16,32], index: 2, kind: output, shape index: {}]
  %s3 = sld [smem:[#allocation0]]
  $region18: #{_lambda_.71} parent=0
    _
  %s5 = ssub.s32 1, %s3
  %s6 = scalar_select 0, %s5, %s3
  $region1: #{_lambda_.71} parent=0
    #allocation2 [shape = 'u8[8192]{0}', space=vmem, size = 0x2000, scoped, tag = 'output window, operand 0, single buffered']
    #allocation3 [shape = 's32[1]{0}', space=sflag, size = 0x4, scoped, tag = 'scoped memory for _lambda_.71']
    %7 = vsyncpa [#allocation3], 0
    // Predicated region
    $region2: #{_lambda_.71} parent=1 // pred_check
      _
    $region3: #{_lambda_.71} parent=1 // pred_check_branch
      %9 = sbr.rel (0) target = $region5
    $region4: #{_lambda_.71} parent=1 // pred_region
      _
    $region5: #{_lambda_.71} parent=1 // pred_fallthru
      _
    // Predicated region
    $region6: #{_lambda_.71} parent=1 // pred_check
      _
    $region7: #{_lambda_.71} parent=1 // pred_check_branch
      %11 = sbr.rel (0) target = $region9
    $region8: #{_lambda_.71} parent=1 // pred_region
      _
    $region9: #{_lambda_.71} parent=1 // pred_fallthru
      _
    %v12 = vld [vmem:[%s0] sm:$0xff]
    %v13 = vld [vmem:[%s0 + $0x8] sm:$0xff]
    %v14 = vmul.f32 %v12, %v12
    %v15 = vmul.f32 %v13, %v13
    %vm16 = vcmask 261120
    %v17 = vsel %vm16, %v14, 0.0
    %18 = vadd.xlane.f32.xlu0 %v17
    %v19 = vpop.xlane.xlu0 %18
    %v20 = vsel %vm16, %v15, 0.0
    %21 = vadd.xlane.f32.xlu0 %v20
    %v22 = vpop.xlane.xlu0 %21
    %v23 = vrcp.pop 32.0
    %v24 = vmul.f32 %v19, %v23
    %v25 = vmul.f32 %v22, %v23
    %v26 = vadd.f32 %v24, 1e-06
    %v27 = vadd.f32 %v25, 1e-06
    %v28 = vrsqrt.pop %v26
    %v29 = vrsqrt.pop %v27
    %v30 = vmul.f32 %v12, %v28
    %v31 = vmul.f32 %v13, %v29
    %v32 = vld [vmem:[%s1] sm:$0x1]
    %v34 = vlaneseq
    %v35 = vshrl.u32 %v34, 7
    %v36 = vsub.s32 0, %v35
    %v37 = vrot.slane %v32, %v36
    %v39 = vmul.f32 %v30, %v37
    %v40 = vmul.f32 %v31, %v37
    %41 = vst.msk [vmem:[#allocation2] sm:$0xff] %vm16, %v39
    %42 = vst.msk [vmem:[#allocation2 + $0x8] sm:$0xff] %vm16, %v40
    // Predicated region
    $region10: #{_lambda_.71} parent=1 // pred_check
      _
    $region11: #{_lambda_.71} parent=1 // pred_check_branch
      %44 = sbr.rel (0) target = $region13
    $region12: #{_lambda_.71} parent=1 // pred_region
      %s46 = ssub.s32 256, 256
      %47 = vsyncadd [#allocation3], %s46
      %s48 = sshll.u32 [#allocation2], 4
      %s49 = int_to_ptr.vmem [resolvable:$true] %s48
      %54 = dma.vmem_to_hbm [thread:$0]  %s49, 256, %s2, [#allocation3], 128, 128, 8
    $region13: #{_lambda_.71} parent=1 // pred_fallthru
      _
    // Predicated region
    $region14: #{_lambda_.71} parent=1 // pred_check
      _
    $region15: #{_lambda_.71} parent=1 // pred_check_branch
      %56 = sbr.rel (0) target = $region17
    $region16: #{_lambda_.71} parent=1 // pred_region
      %57 = dma.done [#allocation3], 256
    $region17: #{_lambda_.71} parent=1 // pred_fallthru
      _
    %58 = vsyncpa [#allocation3], 1

</llo_original>
